<compile_context>
chip_gen: v6e
topology: v6e:2x2x1
jax: 0.10.0
libtpu: 0.0.40
codegen_flags: <defaults>
</compile_context>

<pallas_src>
import jax
import jax.numpy as jnp
from jax import lax
from jax.experimental import pallas as pl
from jax.experimental.pallas import tpu as pltpu

K = 7              # kernel_size for EZScale.COURSE
PAD = 1            # padding
NEG_SLOPE = 0.01   # nn.LeakyReLU default negative_slope
BN_EPS = 1e-5


def _round_up(x, m):
    return (x + m - 1) // m * m


def _lrelu(x):
    return jnp.where(x > 0, x, NEG_SLOPE * x)


def convblock_kernel(x_ref, w1_ref, w2_ref, b1_ref, b2_ref, o_ref, xp_ref, hp_ref):
    """One grid step = block_n batch elements, one matmul per conv.

    x_ref : (Nb, L, C)        unpadded input block (model dtype)
    w*_ref: (K*Cpad, C)       im2col weights, BN scale folded, lane-padded rows
    b*_ref: (1, C) f32        folded BatchNorm shifts
    o_ref : (Nb, L2, C)
    xp_ref: (Nb*F, Cpad)      zero-padded input frames (F rows per batch, F % 8 == 0)
    hp_ref: (Nb*F, Cpad)      zero-padded conv1-output frames; reused as output staging
    """
    Nb, L, C = x_ref.shape
    rows, Cpad = xp_ref.shape
    F = rows // Nb                       # per-batch frame height
    L1 = L + 2 * PAD - (K - 1)           # length after conv1
    L2 = o_ref.shape[1]                  # length after conv2
    M = rows - (K - 1)                   # im2col windows over all frames at once
    dt = xp_ref.dtype

    w1 = w1_ref[...]
    w2 = w2_ref[...]
    b1 = b1_ref[...]
    b2 = b2_ref[...]

    # ---- stage input into zero-padded frames (zero once, then scatter data rows) ----
    xp_ref[...] = jnp.zeros((rows, Cpad), dt)

    def fill(b, carry):
        base = pl.multiple_of(b * F, 8)
        xp_ref[pl.ds(base + PAD, L), 0:C] = x_ref[b]
        return carry

    lax.fori_loop(0, Nb, fill, 0)

    # ---- conv1: ONE im2col matmul over all Nb frames ----
    cols1 = jnp.concatenate([xp_ref[k:k + M, :] for k in range(K)], axis=-1)
    h1 = jnp.dot(cols1, w1, preferred_element_type=jnp.float32)      # (M, C) f32
    h1 = _lrelu(h1 + b1)                                             # bn1 shift + LeakyReLU

    # Zero the rows whose windows straddle two frames so they become conv2's
    # zero padding after the frame-shifted store below (vectorized mask, no loop).
    frame_pos = lax.broadcasted_iota(jnp.int32, (F, 1), 0)
    pos = jnp.tile(frame_pos, (Nb, 1))[0:M, :]                       # (M, 1)
    h1 = jnp.where(pos < L1, h1, 0.0).astype(dt)

    if Cpad > C:
        h1 = jnp.concatenate([h1, jnp.zeros((M, Cpad - C), dt)], axis=-1)

    # h1 row r is the conv1 output for window start r; shifting by PAD rows puts each
    # batch's valid rows exactly at its hp frame interior (F is shared by both convs).
    hp_ref[0:PAD, :] = jnp.zeros((PAD, Cpad), dt)
    hp_ref[PAD:PAD + M, :] = h1
    hp_ref[PAD + M:rows, :] = jnp.zeros((rows - PAD - M, Cpad), dt)

    # ---- conv2: ONE im2col matmul ----
    cols2 = jnp.concatenate([hp_ref[k:k + M, :] for k in range(K)], axis=-1)
    h2 = jnp.dot(cols2, w2, preferred_element_type=jnp.float32)      # (M, C) f32

    # bn2 shift + COURSE residual (x[:, :L2] sits at xp rows r+PAD) + LeakyReLU,
    # all fully vectorized over the M rows.
    res = xp_ref[PAD:PAD + M, 0:C].astype(jnp.float32)
    out = _lrelu(h2 + b2 + res).astype(dt)

    # Stage, then scatter each frame's L2 valid rows into the output block.
    hp_ref[0:M, 0:C] = out

    def extract(b, carry):
        base = pl.multiple_of(b * F, 8)
        o_ref[b] = hp_ref[pl.ds(base, L2), 0:C]
        return carry

    lax.fori_loop(0, Nb, extract, 0)


def _vmem_estimate(nb, L, C, itemsize):
    """Rough per-grid-step VMEM bytes: double-buffered IO blocks, weights, both
    scratches and the im2col temporaries (with a 2x fudge for compiler temps)."""
    F = _round_up(L + 2 * PAD, 8)
    Cpad = _round_up(C, 128)
    L2 = L - 2 * (K - 1 - 2 * PAD)
    rows = nb * F
    scratch = 2 * rows * Cpad * itemsize
    io = 2 * nb * L * C * itemsize + 2 * nb * L2 * C * itemsize
    wts = 2 * 2 * K * Cpad * C * itemsize
    cols = rows * K * Cpad * itemsize + rows * C * 4
    return scratch + io + wts + 2 * cols


def _pick_block_n(N, L, C, itemsize, budget=12 * 2 ** 20):
    """Largest divisor of N fitting the VMEM budget; a single grid step is allowed
    (no forced >=2 steps), but when splitting prefer an even number of steps so
    both v7x TensorCores get equal work."""
    best = 1
    for nb in range(1, N + 1):
        if N % nb == 0 and _vmem_estimate(nb, L, C, itemsize) <= budget:
            best = nb
    steps = N // best
    if steps > 1 and steps % 2 == 1:
        for nb in range(best - 1, 0, -1):
            if N % nb == 0 and (N // nb) % 2 == 0 and \
               _vmem_estimate(nb, L, C, itemsize) <= budget:
                best = nb
                break
    return best


def conv_block(x_nlc, w1_kio, w2_kio, s1, b1, s2, b2, *, block_n=None, interpret=False):
    """x_nlc: (N, L, C) unpadded; w*: (K, Cin, Cout) tap-major; s*/b*: folded BN (C,)/(1,C).

    Returns (N, L2, C) with L2 = L - 2*(K - 1 - 2*PAD)  (COURSE residual crop).
    """
    N, L, C = x_nlc.shape
    assert w1_kio.shape == (K, C, C) and w2_kio.shape == (K, C, C)
    L1 = L + 2 * PAD - (K - 1)
    L2 = L1 + 2 * PAD - (K - 1)
    assert L2 > 0, (L, L2)

    F = _round_up(L + 2 * PAD, 8)
    Cpad = _round_up(C, 128)
    dt = x_nlc.dtype
    itemsize = jnp.dtype(dt).itemsize

    if block_n is None:
        block_n = _pick_block_n(N, L, C, itemsize)
    assert N % block_n == 0, (N, block_n)
    grid = (N // block_n,)
    rows = block_n * F

    s1 = jnp.asarray(s1, jnp.float32).reshape(1, C)
    s2 = jnp.asarray(s2, jnp.float32).reshape(1, C)
    b1 = jnp.asarray(b1, jnp.float32).reshape(1, C)
    b2 = jnp.asarray(b2, jnp.float32).reshape(1, C)

    def prep_w(w_kio, scale):
        # Fold BN scale into the output channels, lane-pad the input-channel rows to
        # Cpad, flatten to (K*Cpad, Cout) for the single im2col contraction.
        w = w_kio.astype(jnp.float32) * scale.reshape(1, 1, C)
        wp = jnp.zeros((K, Cpad, C), jnp.float32).at[:, :C, :].set(w)
        return wp.reshape(K * Cpad, C).astype(dt)

    w1p = prep_w(w1_kio, s1)
    w2p = prep_w(w2_kio, s2)

    est = _vmem_estimate(block_n, L, C, itemsize)
    cp_kwargs = dict(dimension_semantics=("parallel",))
    if est > 8 * 2 ** 20:
        # Raise the scoped-VMEM limit (48 MiB is above all chips' defaults and below
        # every chip's physical VMEM, incl. v7x's 64 MiB).
        cp_kwargs["vmem_limit_bytes"] = 48 * 2 ** 20

    return pl.pallas_call(
        convblock_kernel,
        out_shape=jax.ShapeDtypeStruct((N, L2, C), dt),
        grid_spec=pltpu.PrefetchScalarGridSpec(
            num_scalar_prefetch=0,
            grid=grid,
            in_specs=[
                pl.BlockSpec((block_n, L, C), lambda n: (n, 0, 0)),
                # grid-invariant weights / BN shifts (constant index_map: fetched once)
                pl.BlockSpec((K * Cpad, C), lambda n: (0, 0)),
                pl.BlockSpec((K * Cpad, C), lambda n: (0, 0)),
                pl.BlockSpec((1, C), lambda n: (0, 0)),
                pl.BlockSpec((1, C), lambda n: (0, 0)),
            ],
            out_specs=pl.BlockSpec((block_n, L2, C), lambda n: (n, 0, 0)),
            scratch_shapes=[
                pltpu.VMEM((rows, Cpad), dt),   # padded input frames
                pltpu.VMEM((rows, Cpad), dt),   # padded conv1-output frames / out staging
            ],
        ),
        compiler_params=pltpu.CompilerParams(**cp_kwargs),
        interpret=interpret,
    )(x_nlc, w1p, w2p, b1, b2)


# ---------------- pure-JAX reference (mirrors the PyTorch forward) --------------
def reference(x_ncl, w1_oik, w2_oik, g1, be1, m1, v1, g2, be2, m2, v2):
    def conv(x, w):
        return lax.conv_general_dilated(
            x, w, window_strides=(1,), padding=[(PAD, PAD)],
            dimension_numbers=('NCH', 'OIH', 'NCH'))

    def bn(x, g, b, m, v):
        g, b, m, v = (t[None, :, None] for t in (g, b, m, v))
        return (x - m) / jnp.sqrt(v + BN_EPS) * g + b

    out = conv(x_ncl, w1_oik)
    out = _lrelu(bn(out, g1, be1, m1, v1))
    out = conv(out, w2_oik)
    out = bn(out, g2, be2, m2, v2)
    d = x_ncl.shape[2] - out.shape[2]          # EZScale.COURSE branch
    out = x_ncl[:, :, 0:-d] + out
    return _lrelu(out)


if __name__ == "__main__":
    N, C, L = 2, 8, 32  # in_ch == out_ch (required by the residual add, downsample=None)

    key = jax.random.PRNGKey(0)
    ks = jax.random.split(key, 12)
    x_ncl = jax.random.normal(ks[0], (N, C, L), jnp.float32)

    # Conv weights in PyTorch (O, I, K) layout, bias=False.
    w1_oik = 0.1 * jax.random.normal(ks[1], (C, C, K), jnp.float32)
    w2_oik = 0.1 * jax.random.normal(ks[2], (C, C, K), jnp.float32)

    # BatchNorm parameters + running stats (deterministic, non-trivial).
    g1 = 1.0 + 0.1 * jax.random.normal(ks[3], (C,), jnp.float32)
    be1 = 0.1 * jax.random.normal(ks[4], (C,), jnp.float32)
    m1 = 0.1 * jax.random.normal(ks[5], (C,), jnp.float32)
    v1 = jax.random.uniform(ks[6], (C,), jnp.float32, 0.5, 1.5)
    g2 = 1.0 + 0.1 * jax.random.normal(ks[7], (C,), jnp.float32)
    be2 = 0.1 * jax.random.normal(ks[8], (C,), jnp.float32)
    m2 = 0.1 * jax.random.normal(ks[9], (C,), jnp.float32)
    v2 = jax.random.uniform(ks[10], (C,), jnp.float32, 0.5, 1.5)

    # Fold BN into per-channel scale/shift (inference form).
    s1 = g1 / jnp.sqrt(v1 + BN_EPS)
    b1 = be1 - m1 * s1
    s2 = g2 / jnp.sqrt(v2 + BN_EPS)
    b2 = be2 - m2 * s2

    # Kernel layouts: x -> (N, L, C) channels-last; weights -> (K, in_ch, out_ch).
    x_nlc = jnp.transpose(x_ncl, (0, 2, 1))
    w1_kio = jnp.transpose(w1_oik, (2, 1, 0))
    w2_kio = jnp.transpose(w2_oik, (2, 1, 0))

    out_nlc = jax.block_until_ready(conv_block(x_nlc, w1_kio, w2_kio, s1, b1, s2, b2))
    out_ncl = jnp.transpose(out_nlc, (0, 2, 1))

    ref = reference(x_ncl, w1_oik, w2_oik, g1, be1, m1, v1, g2, be2, m2, v2)
    assert out_ncl.shape == ref.shape, (out_ncl.shape, ref.shape)
    assert jnp.allclose(out_ncl, ref, atol=1e-4, rtol=1e-4), \
        float(jnp.max(jnp.abs(out_ncl - ref)))

    print("KERNEL_OK")
</pallas_src>

<mosaic_0001>
module attributes {stable_mosaic.version = 11 : i64} {
  func.func @convblock_kernel(%arg0: i32, %arg1: memref<2x32x8xf32, #tpu.memory_space<vmem>>, %arg2: memref<896x8xf32, #tpu.memory_space<vmem>>, %arg3: memref<896x8xf32, #tpu.memory_space<vmem>>, %arg4: memref<1x8xf32, #tpu.memory_space<vmem>>, %arg5: memref<1x8xf32, #tpu.memory_space<vmem>>, %arg6: memref<2x24x8xf32, #tpu.memory_space<vmem>>, %arg7: memref<80x128xf32, #tpu.memory_space<vmem>>, %arg8: memref<80x128xf32, #tpu.memory_space<vmem>>) attributes {dimension_semantics = [#tpu.dimension_semantics<parallel>], iteration_bounds = array<i64: 1>, scalar_prefetch = 0 : i64, scratch_operands = 2 : i64, tpu.core_type = #tpu.core_type<tc>, window_params = [{transform_indices = @transform_0, window_bounds = array<i64: 2, 32, 8>}, {pipeline_mode = #tpu.pipeline_mode<synchronous>, transform_indices = @transform_1, window_bounds = array<i64: 896, 8>}, {pipeline_mode = #tpu.pipeline_mode<synchronous>, transform_indices = @transform_2, window_bounds = array<i64: 896, 8>}, {pipeline_mode = #tpu.pipeline_mode<synchronous>, transform_indices = @transform_3, window_bounds = array<i64: 1, 8>}, {pipeline_mode = #tpu.pipeline_mode<synchronous>, transform_indices = @transform_4, window_bounds = array<i64: 1, 8>}, {transform_indices = @transform_5, window_bounds = array<i64: 2, 24, 8>}]} {
    %c0 = arith.constant 0 : index
    %c0_0 = arith.constant 0 : index
    %0 = vector.load %arg2[%c0, %c0_0] : memref<896x8xf32, #tpu.memory_space<vmem>>, vector<896x8xf32>
    %c0_1 = arith.constant 0 : index
    %c0_2 = arith.constant 0 : index
    %1 = vector.load %arg3[%c0_1, %c0_2] : memref<896x8xf32, #tpu.memory_space<vmem>>, vector<896x8xf32>
    %c0_3 = arith.constant 0 : index
    %c0_4 = arith.constant 0 : index
    %2 = vector.load %arg4[%c0_3, %c0_4] : memref<1x8xf32, #tpu.memory_space<vmem>>, vector<1x8xf32>
    %c0_5 = arith.constant 0 : index
    %c0_6 = arith.constant 0 : index
    %3 = vector.load %arg5[%c0_5, %c0_6] : memref<1x8xf32, #tpu.memory_space<vmem>>, vector<1x8xf32>
    %cst = arith.constant 0.000000e+00 : f32
    %4 = vector.broadcast %cst : f32 to vector<80x128xf32>
    %c0_7 = arith.constant 0 : index
    %c0_8 = arith.constant 0 : index
    %5 = vector.load %arg7[%c0_7, %c0_8] : memref<80x128xf32, #tpu.memory_space<vmem>>, vector<80x128xf32>
    tpu.vector_store %arg7[%c0_7, %c0_8], %4 {strides = array<i32>} : memref<80x128xf32, #tpu.memory_space<vmem>>, vector<80x128xf32>,
    %c0_i32 = arith.constant 0 : i32
    %c2_i32 = arith.constant 2 : i32
    %6 = arith.addi %c0_i32, %c2_i32 : i32
    %c1_i32 = arith.constant 1 : i32
    scf.for %arg9 = %c0_i32 to %6 step %c1_i32  : i32 {
      %c40_i32 = arith.constant 40 : i32
      %59 = arith.muli %arg9, %c40_i32 : i32
      %60 = tpu.assume_multiple %59, 8 : i32
      %61 = arith.index_cast %arg9 : i32 to index
      %c0_55 = arith.constant 0 : index
      %c0_56 = arith.constant 0 : index
      %62 = vector.load %arg1[%61, %c0_55, %c0_56] : memref<2x32x8xf32, #tpu.memory_space<vmem>>, vector<1x32x8xf32>
      %63 = vector.shape_cast %62 : vector<1x32x8xf32> to vector<32x8xf32>
      %c1_i32_57 = arith.constant 1 : i32
      %64 = arith.addi %60, %c1_i32_57 : i32
      %65 = arith.index_cast %64 : i32 to index
      %c0_58 = arith.constant 0 : index
      %66 = vector.load %arg7[%65, %c0_58] : memref<80x128xf32, #tpu.memory_space<vmem>>, vector<32x8xf32>
      tpu.vector_store %arg7[%65, %c0_58], %63 {strides = array<i32>} : memref<80x128xf32, #tpu.memory_space<vmem>>, vector<32x8xf32>,
    }
    %c2_i32_9 = arith.constant 2 : i32
    %c0_10 = arith.constant 0 : index
    %c0_11 = arith.constant 0 : index
    %7 = vector.load %arg7[%c0_10, %c0_11] : memref<80x128xf32, #tpu.memory_space<vmem>>, vector<74x128xf32>
    %c1 = arith.constant 1 : index
    %c0_12 = arith.constant 0 : index
    %8 = vector.load %arg7[%c1, %c0_12] : memref<80x128xf32, #tpu.memory_space<vmem>>, vector<74x128xf32>
    %c2 = arith.constant 2 : index
    %c0_13 = arith.constant 0 : index
    %9 = vector.load %arg7[%c2, %c0_13] : memref<80x128xf32, #tpu.memory_space<vmem>>, vector<74x128xf32>
    %c3 = arith.constant 3 : index
    %c0_14 = arith.constant 0 : index
    %10 = vector.load %arg7[%c3, %c0_14] : memref<80x128xf32, #tpu.memory_space<vmem>>, vector<74x128xf32>
    %c4 = arith.constant 4 : index
    %c0_15 = arith.constant 0 : index
    %11 = vector.load %arg7[%c4, %c0_15] : memref<80x128xf32, #tpu.memory_space<vmem>>, vector<74x128xf32>
    %c5 = arith.constant 5 : index
    %c0_16 = arith.constant 0 : index
    %12 = vector.load %arg7[%c5, %c0_16] : memref<80x128xf32, #tpu.memory_space<vmem>>, vector<74x128xf32>
    %c6 = arith.constant 6 : index
    %c0_17 = arith.constant 0 : index
    %13 = vector.load %arg7[%c6, %c0_17] : memref<80x128xf32, #tpu.memory_space<vmem>>, vector<74x128xf32>
    %14 = tpu.concatenate %7, %8, %9, %10, %11, %12, %13 in 1 : vector<74x128xf32>, vector<74x128xf32>, vector<74x128xf32>, vector<74x128xf32>, vector<74x128xf32>, vector<74x128xf32>, vector<74x128xf32> -> vector<74x896xf32>
    %cst_18 = arith.constant dense<0.000000e+00> : vector<74x8xf32>
    %15 = tpu.matmul %14, %0, %cst_18 {dimension_numbers = #tpu.dot_dimension_numbers<[1], [0], [0], [1], [0, 0, 1, 1], [], []>} : vector<74x896xf32>, vector<896x8xf32>, vector<74x8xf32> -> vector<74x8xf32>
    %16 = vector.broadcast %2 : vector<1x8xf32> to vector<74x8xf32>
    %17 = arith.addf %15, %16 : vector<74x8xf32>
    %cst_19 = arith.constant 0.000000e+00 : f32
    %18 = vector.broadcast %cst_19 : f32 to vector<74x8xf32>
    %19 = arith.cmpf ogt, %17, %18 : vector<74x8xf32>
    %cst_20 = arith.constant 0.00999999977 : f32
    %20 = vector.broadcast %cst_20 : f32 to vector<74x8xf32>
    %21 = arith.mulf %20, %17 : vector<74x8xf32>
    %22 = arith.select %19, %17, %21 : vector<74x8xi1>, vector<74x8xf32>
    %23 = tpu.iota {dimensions = array<i32: 0>} : vector<40x1xi32>
    %24 = tpu.concatenate %23, %23 in 0 : vector<40x1xi32>, vector<40x1xi32> -> vector<80x1xi32>
    %25 = vector.extract_strided_slice %24 {offsets = [0, 0], sizes = [74, 1], strides = [1, 1]} : vector<80x1xi32> to vector<74x1xi32>
    %c28_i32 = arith.constant 28 : i32
    %26 = vector.broadcast %c28_i32 : i32 to vector<74x1xi32>
    %27 = arith.cmpi slt, %25, %26 : vector<74x1xi32>
    %cst_21 = arith.constant 0.000000e+00 : f32
    %28 = vector.shape_cast %27 : vector<74x1xi1> to vector<74x1xi1>
    %29 = vector.broadcast %28 : vector<74x1xi1> to vector<74x8xi1>
    %30 = vector.broadcast %cst_21 : f32 to vector<74x8xf32>
    %31 = arith.select %29, %22, %30 : vector<74x8xi1>, vector<74x8xf32>
    %cst_22 = arith.constant 0.000000e+00 : f32
    %32 = vector.broadcast %cst_22 : f32 to vector<74x120xf32>
    %33 = tpu.concatenate %31, %32 in 1 : vector<74x8xf32>, vector<74x120xf32> -> vector<74x128xf32>
    %cst_23 = arith.constant 0.000000e+00 : f32
    %34 = vector.broadcast %cst_23 : f32 to vector<1x128xf32>
    %c0_24 = arith.constant 0 : index
    %c0_25 = arith.constant 0 : index
    %35 = vector.load %arg8[%c0_24, %c0_25] : memref<80x128xf32, #tpu.memory_space<vmem>>, vector<1x128xf32>
    tpu.vector_store %arg8[%c0_24, %c0_25], %34 {strides = array<i32>} : memref<80x128xf32, #tpu.memory_space<vmem>>, vector<1x128xf32>,
    %c1_26 = arith.constant 1 : index
    %c0_27 = arith.constant 0 : index
    %36 = vector.load %arg8[%c1_26, %c0_27] : memref<80x128xf32, #tpu.memory_space<vmem>>, vector<74x128xf32>
    tpu.vector_store %arg8[%c1_26, %c0_27], %33 {strides = array<i32>} : memref<80x128xf32, #tpu.memory_space<vmem>>, vector<74x128xf32>,
    %cst_28 = arith.constant 0.000000e+00 : f32
    %37 = vector.broadcast %cst_28 : f32 to vector<5x128xf32>
    %c75 = arith.constant 75 : index
    %c0_29 = arith.constant 0 : index
    %38 = vector.load %arg8[%c75, %c0_29] : memref<80x128xf32, #tpu.memory_space<vmem>>, vector<5x128xf32>
    tpu.vector_store %arg8[%c75, %c0_29], %37 {strides = array<i32>} : memref<80x128xf32, #tpu.memory_space<vmem>>, vector<5x128xf32>,
    %c0_30 = arith.constant 0 : index
    %c0_31 = arith.constant 0 : index
    %39 = vector.load %arg8[%c0_30, %c0_31] : memref<80x128xf32, #tpu.memory_space<vmem>>, vector<74x128xf32>
    %c1_32 = arith.constant 1 : index
    %c0_33 = arith.constant 0 : index
    %40 = vector.load %arg8[%c1_32, %c0_33] : memref<80x128xf32, #tpu.memory_space<vmem>>, vector<74x128xf32>
    %c2_34 = arith.constant 2 : index
    %c0_35 = arith.constant 0 : index
    %41 = vector.load %arg8[%c2_34, %c0_35] : memref<80x128xf32, #tpu.memory_space<vmem>>, vector<74x128xf32>
    %c3_36 = arith.constant 3 : index
    %c0_37 = arith.constant 0 : index
    %42 = vector.load %arg8[%c3_36, %c0_37] : memref<80x128xf32, #tpu.memory_space<vmem>>, vector<74x128xf32>
    %c4_38 = arith.constant 4 : index
    %c0_39 = arith.constant 0 : index
    %43 = vector.load %arg8[%c4_38, %c0_39] : memref<80x128xf32, #tpu.memory_space<vmem>>, vector<74x128xf32>
    %c5_40 = arith.constant 5 : index
    %c0_41 = arith.constant 0 : index
    %44 = vector.load %arg8[%c5_40, %c0_41] : memref<80x128xf32, #tpu.memory_space<vmem>>, vector<74x128xf32>
    %c6_42 = arith.constant 6 : index
    %c0_43 = arith.constant 0 : index
    %45 = vector.load %arg8[%c6_42, %c0_43] : memref<80x128xf32, #tpu.memory_space<vmem>>, vector<74x128xf32>
    %46 = tpu.concatenate %39, %40, %41, %42, %43, %44, %45 in 1 : vector<74x128xf32>, vector<74x128xf32>, vector<74x128xf32>, vector<74x128xf32>, vector<74x128xf32>, vector<74x128xf32>, vector<74x128xf32> -> vector<74x896xf32>
    %cst_44 = arith.constant dense<0.000000e+00> : vector<74x8xf32>
    %47 = tpu.matmul %46, %1, %cst_44 {dimension_numbers = #tpu.dot_dimension_numbers<[1], [0], [0], [1], [0, 0, 1, 1], [], []>} : vector<74x896xf32>, vector<896x8xf32>, vector<74x8xf32> -> vector<74x8xf32>
    %c1_45 = arith.constant 1 : index
    %c0_46 = arith.constant 0 : index
    %48 = vector.load %arg7[%c1_45, %c0_46] : memref<80x128xf32, #tpu.memory_space<vmem>>, vector<74x8xf32>
    %49 = vector.broadcast %3 : vector<1x8xf32> to vector<74x8xf32>
    %50 = arith.addf %47, %49 : vector<74x8xf32>
    %51 = arith.addf %50, %48 : vector<74x8xf32>
    %cst_47 = arith.constant 0.000000e+00 : f32
    %52 = vector.broadcast %cst_47 : f32 to vector<74x8xf32>
    %53 = arith.cmpf ogt, %51, %52 : vector<74x8xf32>
    %cst_48 = arith.constant 0.00999999977 : f32
    %54 = vector.broadcast %cst_48 : f32 to vector<74x8xf32>
    %55 = arith.mulf %54, %51 : vector<74x8xf32>
    %56 = arith.select %53, %51, %55 : vector<74x8xi1>, vector<74x8xf32>
    %c0_49 = arith.constant 0 : index
    %c0_50 = arith.constant 0 : index
    %57 = vector.load %arg8[%c0_49, %c0_50] : memref<80x128xf32, #tpu.memory_space<vmem>>, vector<74x8xf32>
    tpu.vector_store %arg8[%c0_49, %c0_50], %56 {strides = array<i32>} : memref<80x128xf32, #tpu.memory_space<vmem>>, vector<74x8xf32>,
    %c0_i32_51 = arith.constant 0 : i32
    %c2_i32_52 = arith.constant 2 : i32
    %58 = arith.addi %c0_i32_51, %c2_i32_52 : i32
    %c1_i32_53 = arith.constant 1 : i32
    scf.for %arg9 = %c0_i32_51 to %58 step %c1_i32_53  : i32 {
      %c40_i32 = arith.constant 40 : i32
      %59 = arith.muli %arg9, %c40_i32 : i32
      %60 = tpu.assume_multiple %59, 8 : i32
      %61 = arith.index_cast %60 : i32 to index
      %c0_55 = arith.constant 0 : index
      %62 = vector.load %arg8[%61, %c0_55] : memref<80x128xf32, #tpu.memory_space<vmem>>, vector<24x8xf32>
      %63 = arith.index_cast %arg9 : i32 to index
      %c0_56 = arith.constant 0 : index
      %c0_57 = arith.constant 0 : index
      %64 = vector.load %arg6[%63, %c0_56, %c0_57] : memref<2x24x8xf32, #tpu.memory_space<vmem>>, vector<1x24x8xf32>
      %65 = vector.shape_cast %64 : vector<1x24x8xf32> to vector<24x8xf32>
      %66 = vector.shape_cast %62 : vector<24x8xf32> to vector<1x24x8xf32>
      tpu.vector_store %arg6[%63, %c0_56, %c0_57], %66 {strides = array<i32>} : memref<2x24x8xf32, #tpu.memory_space<vmem>>, vector<1x24x8xf32>,
    }
    %c2_i32_54 = arith.constant 2 : i32
    return
  }
  func.func @transform_0(%arg0: i32) -> (i32, i32, i32) {
    %c0_i32 = arith.constant 0 : i32
    %c0_i32_0 = arith.constant 0 : i32
    %c0_i32_1 = arith.constant 0 : i32
    return %arg0, %c0_i32, %c0_i32_0 : i32, i32, i32
  }
  func.func @transform_1(%arg0: i32) -> (i32, i32) {
    %c0_i32 = arith.constant 0 : i32
    %c0_i32_0 = arith.constant 0 : i32
    %c0_i32_1 = arith.constant 0 : i32
    return %c0_i32, %c0_i32_0 : i32, i32
  }
  func.func @transform_2(%arg0: i32) -> (i32, i32) {
    %c0_i32 = arith.constant 0 : i32
    %c0_i32_0 = arith.constant 0 : i32
    %c0_i32_1 = arith.constant 0 : i32
    return %c0_i32, %c0_i32_0 : i32, i32
  }
  func.func @transform_3(%arg0: i32) -> (i32, i32) {
    %c0_i32 = arith.constant 0 : i32
    %c0_i32_0 = arith.constant 0 : i32
    %c0_i32_1 = arith.constant 0 : i32
    return %c0_i32, %c0_i32_0 : i32, i32
  }
  func.func @transform_4(%arg0: i32) -> (i32, i32) {
    %c0_i32 = arith.constant 0 : i32
    %c0_i32_0 = arith.constant 0 : i32
    %c0_i32_1 = arith.constant 0 : i32
    return %c0_i32, %c0_i32_0 : i32, i32
  }
  func.func @transform_5(%arg0: i32) -> (i32, i32, i32) {
    %c0_i32 = arith.constant 0 : i32
    %c0_i32_0 = arith.constant 0 : i32
    %c0_i32_1 = arith.constant 0 : i32
    return %arg0, %c0_i32, %c0_i32_0 : i32, i32, i32
  }
}

</mosaic_0001>

<llo_original>
// kernel: tpu_custom_call.1
$region0: #{tpu_custom_call.1}
  #allocation0 [shape = 'u32[]', space=smem, size = 0x4, offset = 0x4, fixed_abs, tag = 'smem constant byte address 0x4 - core index']
  #allocation1 [shape = 'u32[144,128]{1,0:T(1,128)}', space=vmem, size = 0x12000, scoped, tag = 'internal scratch']
  #allocation2 [shape = 'f32[80,128]{1,0:T(8,128)}', space=vmem, size = 0xa000, scoped, tag = 'scratch operand']
  #allocation3 [shape = 'f32[80,128]{1,0:T(8,128)}', space=vmem, size = 0xa000, scoped, tag = 'scratch operand']
  %s0 = inlined_call_operand.vmem [shape: f32[2,32,8], index: 0, kind: input, shape index: {}]
  %s1 = inlined_call_operand.vmem [shape: f32[896,8], index: 1, kind: input, shape index: {}]
  %s2 = inlined_call_operand.vmem [shape: f32[896,8], index: 2, kind: input, shape index: {}]
  %s3 = inlined_call_operand.vmem [shape: f32[1,8], index: 3, kind: input, shape index: {}]
  %s4 = inlined_call_operand.vmem [shape: f32[1,8], index: 4, kind: input, shape index: {}]
  %s5 = inlined_call_operand.vmem [shape: f32[2,24,8], index: 5, kind: output, shape index: {}]
  %s6 = sld [smem:[#allocation0]]
  $region44: #{tpu_custom_call.1} parent=0
    _
  %s8 = ssub.s32 1, %s6
  %s9 = scalar_select 0, %s8, %s6
  // Predicated region
  $region2: #{tpu_custom_call.1} parent=0 // pred_check
    _
  $region3: #{tpu_custom_call.1} parent=0 // pred_check_branch
    %11 = sbr.rel (0) target = $region5
  $region4: #{tpu_custom_call.1} parent=0 // pred_region
    _
  $region5: #{tpu_custom_call.1} parent=0 // pred_fallthru
    _
  // Predicated region
  $region6: #{tpu_custom_call.1} parent=0 // pred_check
    _
  $region7: #{tpu_custom_call.1} parent=0 // pred_check_branch
    %13 = sbr.rel (0) target = $region9
  $region8: #{tpu_custom_call.1} parent=0 // pred_region
    _
  $region9: #{tpu_custom_call.1} parent=0 // pred_fallthru
    _
  // Predicated region
  $region10: #{tpu_custom_call.1} parent=0 // pred_check
    _
  $region11: #{tpu_custom_call.1} parent=0 // pred_check_branch
    %15 = sbr.rel (0) target = $region13
  $region12: #{tpu_custom_call.1} parent=0 // pred_region
    _
  $region13: #{tpu_custom_call.1} parent=0 // pred_fallthru
    _
  // Predicated region
  $region14: #{tpu_custom_call.1} parent=0 // pred_check
    _
  $region15: #{tpu_custom_call.1} parent=0 // pred_check_branch
    %17 = sbr.rel (0) target = $region17
  $region16: #{tpu_custom_call.1} parent=0 // pred_region
    _
  $region17: #{tpu_custom_call.1} parent=0 // pred_fallthru
    _
  // Predicated region
  $region18: #{tpu_custom_call.1} parent=0 // pred_check
    _
  $region19: #{tpu_custom_call.1} parent=0 // pred_check_branch
    %19 = sbr.rel (0) target = $region21
  $region20: #{tpu_custom_call.1} parent=0 // pred_region
    _
  $region21: #{tpu_custom_call.1} parent=0 // pred_fallthru
    _
  %v20 = vld [vmem:[%s1] sm:$0xff]
  %v21 = vld [vmem:[%s1 + $0x8] sm:$0xff]
  %v22 = vld [vmem:[%s1 + $0x10] sm:$0xff]
  %v23 = vld [vmem:[%s1 + $0x18] sm:$0xff]
  %v24 = vld [vmem:[%s1 + $0x20] sm:$0xff]
  %v25 = vld [vmem:[%s1 + $0x28] sm:$0xff]
  %v26 = vld [vmem:[%s1 + $0x30] sm:$0xff]
  %v27 = vld [vmem:[%s1 + $0x38] sm:$0xff]
  %v28 = vld [vmem:[%s1 + $0x40] sm:$0xff]
  %v29 = vld [vmem:[%s1 + $0x48] sm:$0xff]
  %v30 = vld [vmem:[%s1 + $0x50] sm:$0xff]
  %v31 = vld [vmem:[%s1 + $0x58] sm:$0xff]
  %v32 = vld [vmem:[%s1 + $0x60] sm:$0xff]
  %v33 = vld [vmem:[%s1 + $0x68] sm:$0xff]
  %v34 = vld [vmem:[%s1 + $0x70] sm:$0xff]
  %v35 = vld [vmem:[%s1 + $0x78] sm:$0xff]
  %v36 = vld [vmem:[%s1 + $0x80] sm:$0xff]
  %v37 = vld [vmem:[%s1 + $0x88] sm:$0xff]
  %v38 = vld [vmem:[%s1 + $0x90] sm:$0xff]
  %v39 = vld [vmem:[%s1 + $0x98] sm:$0xff]
  %v40 = vld [vmem:[%s1 + $0xa0] sm:$0xff]
  %v41 = vld [vmem:[%s1 + $0xa8] sm:$0xff]
  %v42 = vld [vmem:[%s1 + $0xb0] sm:$0xff]
  %v43 = vld [vmem:[%s1 + $0xb8] sm:$0xff]
  %v44 = vld [vmem:[%s1 + $0xc0] sm:$0xff]
  %v45 = vld [vmem:[%s1 + $0xc8] sm:$0xff]
  %v46 = vld [vmem:[%s1 + $0xd0] sm:$0xff]
  %v47 = vld [vmem:[%s1 + $0xd8] sm:$0xff]
  %v48 = vld [vmem:[%s1 + $0xe0] sm:$0xff]
  %v49 = vld [vmem:[%s1 + $0xe8] sm:$0xff]
  %v50 = vld [vmem:[%s1 + $0xf0] sm:$0xff]
  %v51 = vld [vmem:[%s1 + $0xf8] sm:$0xff]
  %v52 = vld [vmem:[%s1 + $0x100] sm:$0xff]
  %v53 = vld [vmem:[%s1 + $0x108] sm:$0xff]
  %v54 = vld [vmem:[%s1 + $0x110] sm:$0xff]
  %v55 = vld [vmem:[%s1 + $0x118] sm:$0xff]
  %v56 = vld [vmem:[%s1 + $0x120] sm:$0xff]
  %v57 = vld [vmem:[%s1 + $0x128] sm:$0xff]
  %v58 = vld [vmem:[%s1 + $0x130] sm:$0xff]
  %v59 = vld [vmem:[%s1 + $0x138] sm:$0xff]
  %v60 = vld [vmem:[%s1 + $0x140] sm:$0xff]
  %v61 = vld [vmem:[%s1 + $0x148] sm:$0xff]
  %v62 = vld [vmem:[%s1 + $0x150] sm:$0xff]
  %v63 = vld [vmem:[%s1 + $0x158] sm:$0xff]
  %v64 = vld [vmem:[%s1 + $0x160] sm:$0xff]
  %v65 = vld [vmem:[%s1 + $0x168] sm:$0xff]
  %v66 = vld [vmem:[%s1 + $0x170] sm:$0xff]
  %v67 = vld [vmem:[%s1 + $0x178] sm:$0xff]
  %v68 = vld [vmem:[%s1 + $0x180] sm:$0xff]
  %v69 = vld [vmem:[%s1 + $0x188] sm:$0xff]
  %v70 = vld [vmem:[%s1 + $0x190] sm:$0xff]
  %v71 = vld [vmem:[%s1 + $0x198] sm:$0xff]
  %v72 = vld [vmem:[%s1 + $0x1a0] sm:$0xff]
  %v73 = vld [vmem:[%s1 + $0x1a8] sm:$0xff]
  %v74 = vld [vmem:[%s1 + $0x1b0] sm:$0xff]
  %v75 = vld [vmem:[%s1 + $0x1b8] sm:$0xff]
  %v76 = vld [vmem:[%s1 + $0x1c0] sm:$0xff]
  %v77 = vld [vmem:[%s1 + $0x1c8] sm:$0xff]
  %v78 = vld [vmem:[%s1 + $0x1d0] sm:$0xff]
  %v79 = vld [vmem:[%s1 + $0x1d8] sm:$0xff]
  %v80 = vld [vmem:[%s1 + $0x1e0] sm:$0xff]
  %v81 = vld [vmem:[%s1 + $0x1e8] sm:$0xff]
  %v82 = vld [vmem:[%s1 + $0x1f0] sm:$0xff]
  %v83 = vld [vmem:[%s1 + $0x1f8] sm:$0xff]
  %v84 = vld [vmem:[%s1 + $0x200] sm:$0xff]
  %v85 = vld [vmem:[%s1 + $0x208] sm:$0xff]
  %v86 = vld [vmem:[%s1 + $0x210] sm:$0xff]
  %v87 = vld [vmem:[%s1 + $0x218] sm:$0xff]
  %v88 = vld [vmem:[%s1 + $0x220] sm:$0xff]
  %v89 = vld [vmem:[%s1 + $0x228] sm:$0xff]
  %v90 = vld [vmem:[%s1 + $0x230] sm:$0xff]
  %v91 = vld [vmem:[%s1 + $0x238] sm:$0xff]
  %v92 = vld [vmem:[%s1 + $0x240] sm:$0xff]
  %v93 = vld [vmem:[%s1 + $0x248] sm:$0xff]
  %v94 = vld [vmem:[%s1 + $0x250] sm:$0xff]
  %v95 = vld [vmem:[%s1 + $0x258] sm:$0xff]
  %v96 = vld [vmem:[%s1 + $0x260] sm:$0xff]
  %v97 = vld [vmem:[%s1 + $0x268] sm:$0xff]
  %v98 = vld [vmem:[%s1 + $0x270] sm:$0xff]
  %v99 = vld [vmem:[%s1 + $0x278] sm:$0xff]
  %v100 = vld [vmem:[%s1 + $0x280] sm:$0xff]
  %v101 = vld [vmem:[%s1 + $0x288] sm:$0xff]
  %v102 = vld [vmem:[%s1 + $0x290] sm:$0xff]
  %v103 = vld [vmem:[%s1 + $0x298] sm:$0xff]
  %v104 = vld [vmem:[%s1 + $0x2a0] sm:$0xff]
  %v105 = vld [vmem:[%s1 + $0x2a8] sm:$0xff]
  %v106 = vld [vmem:[%s1 + $0x2b0] sm:$0xff]
  %v107 = vld [vmem:[%s1 + $0x2b8] sm:$0xff]
  %v108 = vld [vmem:[%s1 + $0x2c0] sm:$0xff]
  %v109 = vld [vmem:[%s1 + $0x2c8] sm:$0xff]
  %v110 = vld [vmem:[%s1 + $0x2d0] sm:$0xff]
  %v111 = vld [vmem:[%s1 + $0x2d8] sm:$0xff]
  %v112 = vld [vmem:[%s1 + $0x2e0] sm:$0xff]
  %v113 = vld [vmem:[%s1 + $0x2e8] sm:$0xff]
  %v114 = vld [vmem:[%s1 + $0x2f0] sm:$0xff]
  %v115 = vld [vmem:[%s1 + $0x2f8] sm:$0xff]
  %v116 = vld [vmem:[%s1 + $0x300] sm:$0xff]
  %v117 = vld [vmem:[%s1 + $0x308] sm:$0xff]
  %v118 = vld [vmem:[%s1 + $0x310] sm:$0xff]
  %v119 = vld [vmem:[%s1 + $0x318] sm:$0xff]
  %v120 = vld [vmem:[%s1 + $0x320] sm:$0xff]
  %v121 = vld [vmem:[%s1 + $0x328] sm:$0xff]
  %v122 = vld [vmem:[%s1 + $0x330] sm:$0xff]
  %v123 = vld [vmem:[%s1 + $0x338] sm:$0xff]
  %v124 = vld [vmem:[%s1 + $0x340] sm:$0xff]
  %v125 = vld [vmem:[%s1 + $0x348] sm:$0xff]
  %v126 = vld [vmem:[%s1 + $0x350] sm:$0xff]
  %v127 = vld [vmem:[%s1 + $0x358] sm:$0xff]
  %v128 = vld [vmem:[%s1 + $0x360] sm:$0xff]
  %v129 = vld [vmem:[%s1 + $0x368] sm:$0xff]
  %v130 = vld [vmem:[%s1 + $0x370] sm:$0xff]
  %v131 = vld [vmem:[%s1 + $0x378] sm:$0xff]
  %v132 = vld [vmem:[%s2] sm:$0xff]
  %v133 = vld [vmem:[%s2 + $0x8] sm:$0xff]
  %v134 = vld [vmem:[%s2 + $0x10] sm:$0xff]
  %v135 = vld [vmem:[%s2 + $0x18] sm:$0xff]
  %v136 = vld [vmem:[%s2 + $0x20] sm:$0xff]
  %v137 = vld [vmem:[%s2 + $0x28] sm:$0xff]
  %v138 = vld [vmem:[%s2 + $0x30] sm:$0xff]
  %v139 = vld [vmem:[%s2 + $0x38] sm:$0xff]
  %v140 = vld [vmem:[%s2 + $0x40] sm:$0xff]
  %v141 = vld [vmem:[%s2 + $0x48] sm:$0xff]
  %v142 = vld [vmem:[%s2 + $0x50] sm:$0xff]
  %v143 = vld [vmem:[%s2 + $0x58] sm:$0xff]
  %v144 = vld [vmem:[%s2 + $0x60] sm:$0xff]
  %v145 = vld [vmem:[%s2 + $0x68] sm:$0xff]
  %v146 = vld [vmem:[%s2 + $0x70] sm:$0xff]
  %v147 = vld [vmem:[%s2 + $0x78] sm:$0xff]
  %v148 = vld [vmem:[%s2 + $0x80] sm:$0xff]
  %v149 = vld [vmem:[%s2 + $0x88] sm:$0xff]
  %v150 = vld [vmem:[%s2 + $0x90] sm:$0xff]
  %v151 = vld [vmem:[%s2 + $0x98] sm:$0xff]
  %v152 = vld [vmem:[%s2 + $0xa0] sm:$0xff]
  %v153 = vld [vmem:[%s2 + $0xa8] sm:$0xff]
  %v154 = vld [vmem:[%s2 + $0xb0] sm:$0xff]
  %v155 = vld [vmem:[%s2 + $0xb8] sm:$0xff]
  %v156 = vld [vmem:[%s2 + $0xc0] sm:$0xff]
  %v157 = vld [vmem:[%s2 + $0xc8] sm:$0xff]
  %v158 = vld [vmem:[%s2 + $0xd0] sm:$0xff]
  %v159 = vld [vmem:[%s2 + $0xd8] sm:$0xff]
  %v160 = vld [vmem:[%s2 + $0xe0] sm:$0xff]
  %v161 = vld [vmem:[%s2 + $0xe8] sm:$0xff]
  %v162 = vld [vmem:[%s2 + $0xf0] sm:$0xff]
  %v163 = vld [vmem:[%s2 + $0xf8] sm:$0xff]
  %v164 = vld [vmem:[%s2 + $0x100] sm:$0xff]
  %v165 = vld [vmem:[%s2 + $0x108] sm:$0xff]
  %v166 = vld [vmem:[%s2 + $0x110] sm:$0xff]
  %v167 = vld [vmem:[%s2 + $0x118] sm:$0xff]
  %v168 = vld [vmem:[%s2 + $0x120] sm:$0xff]
  %v169 = vld [vmem:[%s2 + $0x128] sm:$0xff]
  %v170 = vld [vmem:[%s2 + $0x130] sm:$0xff]
  %v171 = vld [vmem:[%s2 + $0x138] sm:$0xff]
  %v172 = vld [vmem:[%s2 + $0x140] sm:$0xff]
  %v173 = vld [vmem:[%s2 + $0x148] sm:$0xff]
  %v174 = vld [vmem:[%s2 + $0x150] sm:$0xff]
  %v175 = vld [vmem:[%s2 + $0x158] sm:$0xff]
  %v176 = vld [vmem:[%s2 + $0x160] sm:$0xff]
  %v177 = vld [vmem:[%s2 + $0x168] sm:$0xff]
  %v178 = vld [vmem:[%s2 + $0x170] sm:$0xff]
  %v179 = vld [vmem:[%s2 + $0x178] sm:$0xff]
  %v180 = vld [vmem:[%s2 + $0x180] sm:$0xff]
  %v181 = vld [vmem:[%s2 + $0x188] sm:$0xff]
  %v182 = vld [vmem:[%s2 + $0x190] sm:$0xff]
  %v183 = vld [vmem:[%s2 + $0x198] sm:$0xff]
  %v184 = vld [vmem:[%s2 + $0x1a0] sm:$0xff]
  %v185 = vld [vmem:[%s2 + $0x1a8] sm:$0xff]
  %v186 = vld [vmem:[%s2 + $0x1b0] sm:$0xff]
  %v187 = vld [vmem:[%s2 + $0x1b8] sm:$0xff]
  %v188 = vld [vmem:[%s2 + $0x1c0] sm:$0xff]
  %v189 = vld [vmem:[%s2 + $0x1c8] sm:$0xff]
  %v190 = vld [vmem:[%s2 + $0x1d0] sm:$0xff]
  %v191 = vld [vmem:[%s2 + $0x1d8] sm:$0xff]
  %v192 = vld [vmem:[%s2 + $0x1e0] sm:$0xff]
  %v193 = vld [vmem:[%s2 + $0x1e8] sm:$0xff]
  %v194 = vld [vmem:[%s2 + $0x1f0] sm:$0xff]
  %v195 = vld [vmem:[%s2 + $0x1f8] sm:$0xff]
  %v196 = vld [vmem:[%s2 + $0x200] sm:$0xff]
  %v197 = vld [vmem:[%s2 + $0x208] sm:$0xff]
  %v198 = vld [vmem:[%s2 + $0x210] sm:$0xff]
  %v199 = vld [vmem:[%s2 + $0x218] sm:$0xff]
  %v200 = vld [vmem:[%s2 + $0x220] sm:$0xff]
  %v201 = vld [vmem:[%s2 + $0x228] sm:$0xff]
  %v202 = vld [vmem:[%s2 + $0x230] sm:$0xff]
  %v203 = vld [vmem:[%s2 + $0x238] sm:$0xff]
  %v204 = vld [vmem:[%s2 + $0x240] sm:$0xff]
  %v205 = vld [vmem:[%s2 + $0x248] sm:$0xff]
  %v206 = vld [vmem:[%s2 + $0x250] sm:$0xff]
  %v207 = vld [vmem:[%s2 + $0x258] sm:$0xff]
  %v208 = vld [vmem:[%s2 + $0x260] sm:$0xff]
  %v209 = vld [vmem:[%s2 + $0x268] sm:$0xff]
  %v210 = vld [vmem:[%s2 + $0x270] sm:$0xff]
  %v211 = vld [vmem:[%s2 + $0x278] sm:$0xff]
  %v212 = vld [vmem:[%s2 + $0x280] sm:$0xff]
  %v213 = vld [vmem:[%s2 + $0x288] sm:$0xff]
  %v214 = vld [vmem:[%s2 + $0x290] sm:$0xff]
  %v215 = vld [vmem:[%s2 + $0x298] sm:$0xff]
  %v216 = vld [vmem:[%s2 + $0x2a0] sm:$0xff]
  %v217 = vld [vmem:[%s2 + $0x2a8] sm:$0xff]
  %v218 = vld [vmem:[%s2 + $0x2b0] sm:$0xff]
  %v219 = vld [vmem:[%s2 + $0x2b8] sm:$0xff]
  %v220 = vld [vmem:[%s2 + $0x2c0] sm:$0xff]
  %v221 = vld [vmem:[%s2 + $0x2c8] sm:$0xff]
  %v222 = vld [vmem:[%s2 + $0x2d0] sm:$0xff]
  %v223 = vld [vmem:[%s2 + $0x2d8] sm:$0xff]
  %v224 = vld [vmem:[%s2 + $0x2e0] sm:$0xff]
  %v225 = vld [vmem:[%s2 + $0x2e8] sm:$0xff]
  %v226 = vld [vmem:[%s2 + $0x2f0] sm:$0xff]
  %v227 = vld [vmem:[%s2 + $0x2f8] sm:$0xff]
  %v228 = vld [vmem:[%s2 + $0x300] sm:$0xff]
  %v229 = vld [vmem:[%s2 + $0x308] sm:$0xff]
  %v230 = vld [vmem:[%s2 + $0x310] sm:$0xff]
  %v231 = vld [vmem:[%s2 + $0x318] sm:$0xff]
  %v232 = vld [vmem:[%s2 + $0x320] sm:$0xff]
  %v233 = vld [vmem:[%s2 + $0x328] sm:$0xff]
  %v234 = vld [vmem:[%s2 + $0x330] sm:$0xff]
  %v235 = vld [vmem:[%s2 + $0x338] sm:$0xff]
  %v236 = vld [vmem:[%s2 + $0x340] sm:$0xff]
  %v237 = vld [vmem:[%s2 + $0x348] sm:$0xff]
  %v238 = vld [vmem:[%s2 + $0x350] sm:$0xff]
  %v239 = vld [vmem:[%s2 + $0x358] sm:$0xff]
  %v240 = vld [vmem:[%s2 + $0x360] sm:$0xff]
  %v241 = vld [vmem:[%s2 + $0x368] sm:$0xff]
  %v242 = vld [vmem:[%s2 + $0x370] sm:$0xff]
  %v243 = vld [vmem:[%s2 + $0x378] sm:$0xff]
  %v244 = vld [vmem:[%s3] sm:$0x1]
  %v245 = vld [vmem:[%s4] sm:$0x1]
  %246 = vst [vmem:[#allocation2] sm:$0xff] 0.0
  %247 = vst [vmem:[#allocation2 + $0x8] sm:$0xff] 0.0
  %248 = vst [vmem:[#allocation2 + $0x10] sm:$0xff] 0.0
  %249 = vst [vmem:[#allocation2 + $0x18] sm:$0xff] 0.0
  %250 = vst [vmem:[#allocation2 + $0x20] sm:$0xff] 0.0
  %251 = vst [vmem:[#allocation2 + $0x28] sm:$0xff] 0.0
  %252 = vst [vmem:[#allocation2 + $0x30] sm:$0xff] 0.0
  %253 = vst [vmem:[#allocation2 + $0x38] sm:$0xff] 0.0
  %254 = vst [vmem:[#allocation2 + $0x40] sm:$0xff] 0.0
  %255 = vst [vmem:[#allocation2 + $0x48] sm:$0xff] 0.0
  loop: start=0, step=1, limit=2
  $region22: #{tpu_custom_call.1} parent=0 // loop_pre_header
    _
  $region23: #{tpu_custom_call.1} parent=0 // loop_header
    %s257 = sphi 0, %s261
    %p258 = scmp.ge.s32.totalorder %s257, 2
  $region24: #{tpu_custom_call.1} parent=0 // loop_header_branch
    %260 = sbr.rel (%p258) target = $region28
  $region25: #{tpu_custom_call.1} parent=0 // loop_body
    %s262 = smul.u32 %s257, 40
    %s263 = smul.u32 %s257, 32
    %s264 = scalar_lea.vmem %s0, %s263
    %v265 = vld [vmem:[%s264] sm:$0xff]
    %v266 = vld [vmem:[%s264 + $0x8] sm:$0xff]
    %v267 = vld [vmem:[%s264 + $0x10] sm:$0xff]
    %v268 = vld [vmem:[%s264 + $0x18] sm:$0xff]
    %s269 = sadd.s32 %s262, 1
    %s270 = scalar_lea.vmem [#allocation2], %s269
    %vm271 = vcmask 64512
    %272 = vst.msk [vmem:[%s270] sm:$0xff] %vm271, %v265
    %273 = vst.msk [vmem:[%s270 + $0x8] sm:$0xff] %vm271, %v266
    %274 = vst.msk [vmem:[%s270 + $0x10] sm:$0xff] %vm271, %v267
    %275 = vst.msk [vmem:[%s270 + $0x18] sm:$0xff] %vm271, %v268
  $region26: #{tpu_custom_call.1} parent=0 // loop_footer
    %s261 = sadd.s32 1, %s257
  $region27: #{tpu_custom_call.1} parent=0 // loop_footer_branch
    %256 = sbr.rel target = $region23
  $region28: #{tpu_custom_call.1} parent=0 // loop_exit
    _
  %v276 = vld [vmem:[#allocation2] sm:$0xff]
  %v277 = vld [vmem:[#allocation2 + $0x8] sm:$0xff]
  %v278 = vld [vmem:[#allocation2 + $0x10] sm:$0xff]
  %v279 = vld [vmem:[#allocation2 + $0x18] sm:$0xff]
  %v280 = vld [vmem:[#allocation2 + $0x20] sm:$0xff]
  %v281 = vld [vmem:[#allocation2 + $0x28] sm:$0xff]
  %v282 = vld [vmem:[#allocation2 + $0x30] sm:$0xff]
  %v283 = vld [vmem:[#allocation2 + $0x38] sm:$0xff]
  %v284 = vld [vmem:[#allocation2 + $0x40] sm:$0xff]
  %v285 = vld [vmem:[#allocation2 + $0x48] sm:$0x3]
  %v286 = vld [vmem:[#allocation2 + $0x1] sm:$0xff]
  %v287 = vld [vmem:[#allocation2 + $0x9] sm:$0xff]
  %v288 = vld [vmem:[#allocation2 + $0x11] sm:$0xff]
  %v289 = vld [vmem:[#allocation2 + $0x19] sm:$0xff]
  %v290 = vld [vmem:[#allocation2 + $0x21] sm:$0xff]
  %v291 = vld [vmem:[#allocation2 + $0x29] sm:$0xff]
  %v292 = vld [vmem:[#allocation2 + $0x31] sm:$0xff]
  %v293 = vld [vmem:[#allocation2 + $0x39] sm:$0xff]
  %v294 = vld [vmem:[#allocation2 + $0x41] sm:$0xff]
  %v295 = vld [vmem:[#allocation2 + $0x49] sm:$0x3]
  %v296 = vld [vmem:[#allocation2 + $0x2] sm:$0xff]
  %v297 = vld [vmem:[#allocation2 + $0xa] sm:$0xff]
  %v298 = vld [vmem:[#allocation2 + $0x12] sm:$0xff]
  %v299 = vld [vmem:[#allocation2 + $0x1a] sm:$0xff]
  %v300 = vld [vmem:[#allocation2 + $0x22] sm:$0xff]
  %v301 = vld [vmem:[#allocation2 + $0x2a] sm:$0xff]
  %v302 = vld [vmem:[#allocation2 + $0x32] sm:$0xff]
  %v303 = vld [vmem:[#allocation2 + $0x3a] sm:$0xff]
  %v304 = vld [vmem:[#allocation2 + $0x42] sm:$0xff]
  %v305 = vld [vmem:[#allocation2 + $0x4a] sm:$0x3]
  %v306 = vld [vmem:[#allocation2 + $0x3] sm:$0xff]
  %v307 = vld [vmem:[#allocation2 + $0xb] sm:$0xff]
  %v308 = vld [vmem:[#allocation2 + $0x13] sm:$0xff]
  %v309 = vld [vmem:[#allocation2 + $0x1b] sm:$0xff]
  %v310 = vld [vmem:[#allocation2 + $0x23] sm:$0xff]
  %v311 = vld [vmem:[#allocation2 + $0x2b] sm:$0xff]
  %v312 = vld [vmem:[#allocation2 + $0x33] sm:$0xff]
  %v313 = vld [vmem:[#allocation2 + $0x3b] sm:$0xff]
  %v314 = vld [vmem:[#allocation2 + $0x43] sm:$0xff]
  %v315 = vld [vmem:[#allocation2 + $0x4b] sm:$0x3]
  %v316 = vld [vmem:[#allocation2 + $0x4] sm:$0xff]
  %v317 = vld [vmem:[#allocation2 + $0xc] sm:$0xff]
  %v318 = vld [vmem:[#allocation2 + $0x14] sm:$0xff]
  %v319 = vld [vmem:[#allocation2 + $0x1c] sm:$0xff]
  %v320 = vld [vmem:[#allocation2 + $0x24] sm:$0xff]
  %v321 = vld [vmem:[#allocation2 + $0x2c] sm:$0xff]
  %v322 = vld [vmem:[#allocation2 + $0x34] sm:$0xff]
  %v323 = vld [vmem:[#allocation2 + $0x3c] sm:$0xff]
  %v324 = vld [vmem:[#allocation2 + $0x44] sm:$0xff]
  %v325 = vld [vmem:[#allocation2 + $0x4c] sm:$0x3]
  %v326 = vld [vmem:[#allocation2 + $0x5] sm:$0xff]
  %v327 = vld [vmem:[#allocation2 + $0xd] sm:$0xff]
  %v328 = vld [vmem:[#allocation2 + $0x15] sm:$0xff]
  %v329 = vld [vmem:[#allocation2 + $0x1d] sm:$0xff]
  %v330 = vld [vmem:[#allocation2 + $0x25] sm:$0xff]
  %v331 = vld [vmem:[#allocation2 + $0x2d] sm:$0xff]
  %v332 = vld [vmem:[#allocation2 + $0x35] sm:$0xff]
  %v333 = vld [vmem:[#allocation2 + $0x3d] sm:$0xff]
  %v334 = vld [vmem:[#allocation2 + $0x45] sm:$0xff]
  %v335 = vld [vmem:[#allocation2 + $0x4d] sm:$0x3]
  %v336 = vld [vmem:[#allocation2 + $0x6] sm:$0xff]
  %v337 = vld [vmem:[#allocation2 + $0xe] sm:$0xff]
  %v338 = vld [vmem:[#allocation2 + $0x16] sm:$0xff]
  %v339 = vld [vmem:[#allocation2 + $0x1e] sm:$0xff]
  %v340 = vld [vmem:[#allocation2 + $0x26] sm:$0xff]
  %v341 = vld [vmem:[#allocation2 + $0x2e] sm:$0xff]
  %v342 = vld [vmem:[#allocation2 + $0x36] sm:$0xff]
  %v343 = vld [vmem:[#allocation2 + $0x3e] sm:$0xff]
  %v344 = vld [vmem:[#allocation2 + $0x46] sm:$0xff]
  %v345 = vld [vmem:[#allocation2 + $0x4e] sm:$0x3]
  %v347 = vlaneseq
  %v348 = vshrl.u32 %v347, 7
  %v349 = vsub.s32 0, %v348
  %v350 = vrot.slane %v244, %v349
  %352 = vmatprep.subr.mxu0 0.0
  %353 = vmatpush1.msra.mxu0 %v35
  %354 = vmatprep.subr.mxu0 0.0
  %355 = vmatpush1.msra.mxu0 %v34
  %356 = vmatprep.subr.mxu0 0.0
  %357 = vmatpush1.msra.mxu0 %v33
  %358 = vmatprep.subr.mxu0 0.0
  %359 = vmatpush1.msra.mxu0 %v32
  %360 = vmatprep.subr.mxu0 0.0
  %361 = vmatpush1.msra.mxu0 %v31
  %362 = vmatprep.subr.mxu0 0.0
  %363 = vmatpush1.msra.mxu0 %v30
  %364 = vmatprep.subr.mxu0 0.0
  %365 = vmatpush1.msra.mxu0 %v29
  %366 = vmatprep.subr.mxu0 0.0
  %367 = vmatpush1.msra.mxu0 %v28
  %368 = vmatprep.subr.mxu0 0.0
  %369 = vmatpush1.msra.mxu0 %v27
  %370 = vmatprep.subr.mxu0 0.0
  %371 = vmatpush1.msra.mxu0 %v26
  %372 = vmatprep.subr.mxu0 0.0
  %373 = vmatpush1.msra.mxu0 %v25
  %374 = vmatprep.subr.mxu0 0.0
  %375 = vmatpush1.msra.mxu0 %v24
  %376 = vmatprep.subr.mxu0 0.0
  %377 = vmatpush1.msra.mxu0 %v23
  %378 = vmatprep.subr.mxu0 0.0
  %379 = vmatpush1.msra.mxu0 %v22
  %380 = vmatprep.subr.mxu0 0.0
  %381 = vmatpush1.msra.mxu0 %v21
  %382 = vmatprep.subr.mxu0 0.0
  %383 = vmatpush1.msra.mxu0 %v20
  %384 = vmatprep.subr.mxu0 0.0
  %385 = vmatpush2.msra.mxu0 %v51
  %386 = vmatprep.subr.mxu0 0.0
  %387 = vmatpush2.msra.mxu0 %v50
  %388 = vmatprep.subr.mxu0 0.0
  %389 = vmatpush2.msra.mxu0 %v49
  %390 = vmatprep.subr.mxu0 0.0
  %391 = vmatpush2.msra.mxu0 %v48
  %392 = vmatprep.subr.mxu0 0.0
  %393 = vmatpush2.msra.mxu0 %v47
  %394 = vmatprep.subr.mxu0 0.0
  %395 = vmatpush2.msra.mxu0 %v46
  %396 = vmatprep.subr.mxu0 0.0
  %397 = vmatpush2.msra.mxu0 %v45
  %398 = vmatprep.subr.mxu0 0.0
  %399 = vmatpush2.msra.mxu0 %v44
  %400 = vmatprep.subr.mxu0 0.0
  %401 = vmatpush2.msra.mxu0 %v43
  %402 = vmatprep.subr.mxu0 0.0
  %403 = vmatpush2.msra.mxu0 %v42
  %404 = vmatprep.subr.mxu0 0.0
  %405 = vmatpush2.msra.mxu0 %v41
  %406 = vmatprep.subr.mxu0 0.0
  %407 = vmatpush2.msra.mxu0 %v40
  %408 = vmatprep.subr.mxu0 0.0
  %409 = vmatpush2.msra.mxu0 %v39
  %410 = vmatprep.subr.mxu0 0.0
  %411 = vmatpush2.msra.mxu0 %v38
  %412 = vmatprep.subr.mxu0 0.0
  %413 = vmatpush2.msra.mxu0 %v37
  %414 = vmatprep.subr.mxu0 0.0
  %415 = vmatpush2.msra.mxu0 %v36
  %416 = vmatprep.mubr.f32.mxu0 %v286
  %417 = vmatmul.mubr.f32.gmra.mxu0 %v276
  %v418 = vpop.f32.mrf.mxu0
  %v419 = vadd.f32 %v350, %v418
  %v420 = vpop.f32.mrf.mxu0
  %421 = vmatprep.mubr.f32.mxu0 %v287
  %422 = vmatmul.mubr.f32.gmra.mxu0 %v277
  %v423 = vpop.f32.mrf.mxu0
  %v424 = vadd.f32 %v350, %v423
  %v425 = vpop.f32.mrf.mxu0
  %426 = vmatprep.mubr.f32.mxu0 %v288
  %427 = vmatmul.mubr.f32.gmra.mxu0 %v278
  %v428 = vpop.f32.mrf.mxu0
  %v429 = vadd.f32 %v350, %v428
  %v430 = vpop.f32.mrf.mxu0
  %431 = vmatprep.mubr.f32.mxu0 %v289
  %432 = vmatmul.mubr.f32.gmra.mxu0 %v279
  %v433 = vpop.f32.mrf.mxu0
  %v434 = vadd.f32 %v350, %v433
  %v435 = vpop.f32.mrf.mxu0
  %436 = vmatprep.mubr.f32.mxu0 %v290
  %437 = vmatmul.mubr.f32.gmra.mxu0 %v280
  %v438 = vpop.f32.mrf.mxu0
  %v439 = vadd.f32 %v350, %v438
  %v440 = vpop.f32.mrf.mxu0
  %441 = vmatprep.mubr.f32.mxu0 %v291
  %442 = vmatmul.mubr.f32.gmra.mxu0 %v281
  %v443 = vpop.f32.mrf.mxu0
  %v444 = vadd.f32 %v350, %v443
  %v445 = vpop.f32.mrf.mxu0
  %446 = vmatprep.mubr.f32.mxu0 %v292
  %447 = vmatmul.mubr.f32.gmra.mxu0 %v282
  %v448 = vpop.f32.mrf.mxu0
  %v449 = vadd.f32 %v350, %v448
  %v450 = vpop.f32.mrf.mxu0
  %451 = vmatprep.mubr.f32.mxu0 %v293
  %452 = vmatmul.mubr.f32.gmra.mxu0 %v283
  %v453 = vpop.f32.mrf.mxu0
  %v454 = vadd.f32 %v350, %v453
  %v455 = vpop.f32.mrf.mxu0
  %456 = vmatprep.mubr.f32.mxu0 %v294
  %457 = vmatmul.mubr.f32.gmra.mxu0 %v284
  %v458 = vpop.f32.mrf.mxu0
  %v459 = vadd.f32 %v350, %v458
  %v460 = vpop.f32.mrf.mxu0
  %461 = vmatprep.mubr.f32.mxu0 %v295
  %462 = vmatmul.mubr.f32.gmra.mxu0 %v285
  %v463 = vpop.f32.mrf.mxu0
  %v464 = vadd.f32 %v350, %v463
  %v465 = vpop.f32.mrf.mxu0
  %466 = vdwg.mxu0
  %467 = vmatprep.subr.mxu0 0.0
  %468 = vmatpush1.msra.mxu0 %v67
  %469 = vmatprep.subr.mxu0 0.0
  %470 = vmatpush1.msra.mxu0 %v66
  %471 = vmatprep.subr.mxu0 0.0
  %472 = vmatpush1.msra.mxu0 %v65
  %473 = vmatprep.subr.mxu0 0.0
  %474 = vmatpush1.msra.mxu0 %v64
  %475 = vmatprep.subr.mxu0 0.0
  %476 = vmatpush1.msra.mxu0 %v63
  %477 = vmatprep.subr.mxu0 0.0
  %478 = vmatpush1.msra.mxu0 %v62
  %479 = vmatprep.subr.mxu0 0.0
  %480 = vmatpush1.msra.mxu0 %v61
  %481 = vmatprep.subr.mxu0 0.0
  %482 = vmatpush1.msra.mxu0 %v60
  %483 = vmatprep.subr.mxu0 0.0
  %484 = vmatpush1.msra.mxu0 %v59
  %485 = vmatprep.subr.mxu0 0.0
  %486 = vmatpush1.msra.mxu0 %v58
  %487 = vmatprep.subr.mxu0 0.0
  %488 = vmatpush1.msra.mxu0 %v57
  %489 = vmatprep.subr.mxu0 0.0
  %490 = vmatpush1.msra.mxu0 %v56
  %491 = vmatprep.subr.mxu0 0.0
  %492 = vmatpush1.msra.mxu0 %v55
  %493 = vmatprep.subr.mxu0 0.0
  %494 = vmatpush1.msra.mxu0 %v54
  %495 = vmatprep.subr.mxu0 0.0
  %496 = vmatpush1.msra.mxu0 %v53
  %497 = vmatprep.subr.mxu0 0.0
  %498 = vmatpush1.msra.mxu0 %v52
  %499 = vmatprep.subr.mxu0 0.0
  %500 = vmatpush2.msra.mxu0 %v83
  %501 = vmatprep.subr.mxu0 0.0
  %502 = vmatpush2.msra.mxu0 %v82
  %503 = vmatprep.subr.mxu0 0.0
  %504 = vmatpush2.msra.mxu0 %v81
  %505 = vmatprep.subr.mxu0 0.0
  %506 = vmatpush2.msra.mxu0 %v80
  %507 = vmatprep.subr.mxu0 0.0
  %508 = vmatpush2.msra.mxu0 %v79
  %509 = vmatprep.subr.mxu0 0.0
  %510 = vmatpush2.msra.mxu0 %v78
  %511 = vmatprep.subr.mxu0 0.0
  %512 = vmatpush2.msra.mxu0 %v77
  %513 = vmatprep.subr.mxu0 0.0
  %514 = vmatpush2.msra.mxu0 %v76
  %515 = vmatprep.subr.mxu0 0.0
  %516 = vmatpush2.msra.mxu0 %v75
  %517 = vmatprep.subr.mxu0 0.0
  %518 = vmatpush2.msra.mxu0 %v74
  %519 = vmatprep.subr.mxu0 0.0
  %520 = vmatpush2.msra.mxu0 %v73
  %521 = vmatprep.subr.mxu0 0.0
  %522 = vmatpush2.msra.mxu0 %v72
  %523 = vmatprep.subr.mxu0 0.0
  %524 = vmatpush2.msra.mxu0 %v71
  %525 = vmatprep.subr.mxu0 0.0
  %526 = vmatpush2.msra.mxu0 %v70
  %527 = vmatprep.subr.mxu0 0.0
  %528 = vmatpush2.msra.mxu0 %v69
  %529 = vmatprep.subr.mxu0 0.0
  %530 = vmatpush2.msra.mxu0 %v68
  %531 = vmatprep.mubr.f32.mxu0 %v306
  %532 = vmatmul.mubr.f32.gmra.mxu0 %v296
  %v533 = vpop.f32.mrf.mxu0
  %v534 = vadd.f32 %v419, %v533
  %v535 = vpop.f32.mrf.mxu0
  %536 = vmatprep.mubr.f32.mxu0 %v307
  %537 = vmatmul.mubr.f32.gmra.mxu0 %v297
  %v538 = vpop.f32.mrf.mxu0
  %v539 = vadd.f32 %v424, %v538
  %v540 = vpop.f32.mrf.mxu0
  %541 = vmatprep.mubr.f32.mxu0 %v308
  %542 = vmatmul.mubr.f32.gmra.mxu0 %v298
  %v543 = vpop.f32.mrf.mxu0
  %v544 = vadd.f32 %v429, %v543
  %v545 = vpop.f32.mrf.mxu0
  %546 = vmatprep.mubr.f32.mxu0 %v309
  %547 = vmatmul.mubr.f32.gmra.mxu0 %v299
  %v548 = vpop.f32.mrf.mxu0
  %v549 = vadd.f32 %v434, %v548
  %v550 = vpop.f32.mrf.mxu0
  %551 = vmatprep.mubr.f32.mxu0 %v310
  %552 = vmatmul.mubr.f32.gmra.mxu0 %v300
  %v553 = vpop.f32.mrf.mxu0
  %v554 = vadd.f32 %v439, %v553
  %v555 = vpop.f32.mrf.mxu0
  %556 = vmatprep.mubr.f32.mxu0 %v311
  %557 = vmatmul.mubr.f32.gmra.mxu0 %v301
  %v558 = vpop.f32.mrf.mxu0
  %v559 = vadd.f32 %v444, %v558
  %v560 = vpop.f32.mrf.mxu0
  %561 = vmatprep.mubr.f32.mxu0 %v312
  %562 = vmatmul.mubr.f32.gmra.mxu0 %v302
  %v563 = vpop.f32.mrf.mxu0
  %v564 = vadd.f32 %v449, %v563
  %v565 = vpop.f32.mrf.mxu0
  %566 = vmatprep.mubr.f32.mxu0 %v313
  %567 = vmatmul.mubr.f32.gmra.mxu0 %v303
  %v568 = vpop.f32.mrf.mxu0
  %v569 = vadd.f32 %v454, %v568
  %v570 = vpop.f32.mrf.mxu0
  %571 = vmatprep.mubr.f32.mxu0 %v314
  %572 = vmatmul.mubr.f32.gmra.mxu0 %v304
  %v573 = vpop.f32.mrf.mxu0
  %v574 = vadd.f32 %v459, %v573
  %v575 = vpop.f32.mrf.mxu0
  %576 = vmatprep.mubr.f32.mxu0 %v315
  %577 = vmatmul.mubr.f32.gmra.mxu0 %v305
  %v578 = vpop.f32.mrf.mxu0
  %v579 = vadd.f32 %v464, %v578
  %v580 = vpop.f32.mrf.mxu0
  %581 = vdwg.mxu0
  %582 = vmatprep.subr.mxu0 0.0
  %583 = vmatpush1.msra.mxu0 %v99
  %584 = vmatprep.subr.mxu0 0.0
  %585 = vmatpush1.msra.mxu0 %v98
  %586 = vmatprep.subr.mxu0 0.0
  %587 = vmatpush1.msra.mxu0 %v97
  %588 = vmatprep.subr.mxu0 0.0
  %589 = vmatpush1.msra.mxu0 %v96
  %590 = vmatprep.subr.mxu0 0.0
  %591 = vmatpush1.msra.mxu0 %v95
  %592 = vmatprep.subr.mxu0 0.0
  %593 = vmatpush1.msra.mxu0 %v94
  %594 = vmatprep.subr.mxu0 0.0
  %595 = vmatpush1.msra.mxu0 %v93
  %596 = vmatprep.subr.mxu0 0.0
  %597 = vmatpush1.msra.mxu0 %v92
  %598 = vmatprep.subr.mxu0 0.0
  %599 = vmatpush1.msra.mxu0 %v91
  %600 = vmatprep.subr.mxu0 0.0
  %601 = vmatpush1.msra.mxu0 %v90
  %602 = vmatprep.subr.mxu0 0.0
  %603 = vmatpush1.msra.mxu0 %v89
  %604 = vmatprep.subr.mxu0 0.0
  %605 = vmatpush1.msra.mxu0 %v88
  %606 = vmatprep.subr.mxu0 0.0
  %607 = vmatpush1.msra.mxu0 %v87
  %608 = vmatprep.subr.mxu0 0.0
  %609 = vmatpush1.msra.mxu0 %v86
  %610 = vmatprep.subr.mxu0 0.0
  %611 = vmatpush1.msra.mxu0 %v85
  %612 = vmatprep.subr.mxu0 0.0
  %613 = vmatpush1.msra.mxu0 %v84
  %614 = vmatprep.subr.mxu0 0.0
  %615 = vmatpush2.msra.mxu0 %v115
  %616 = vmatprep.subr.mxu0 0.0
  %617 = vmatpush2.msra.mxu0 %v114
  %618 = vmatprep.subr.mxu0 0.0
  %619 = vmatpush2.msra.mxu0 %v113
  %620 = vmatprep.subr.mxu0 0.0
  %621 = vmatpush2.msra.mxu0 %v112
  %622 = vmatprep.subr.mxu0 0.0
  %623 = vmatpush2.msra.mxu0 %v111
  %624 = vmatprep.subr.mxu0 0.0
  %625 = vmatpush2.msra.mxu0 %v110
  %626 = vmatprep.subr.mxu0 0.0
  %627 = vmatpush2.msra.mxu0 %v109
  %628 = vmatprep.subr.mxu0 0.0
  %629 = vmatpush2.msra.mxu0 %v108
  %630 = vmatprep.subr.mxu0 0.0
  %631 = vmatpush2.msra.mxu0 %v107
  %632 = vmatprep.subr.mxu0 0.0
  %633 = vmatpush2.msra.mxu0 %v106
  %634 = vmatprep.subr.mxu0 0.0
  %635 = vmatpush2.msra.mxu0 %v105
  %636 = vmatprep.subr.mxu0 0.0
  %637 = vmatpush2.msra.mxu0 %v104
  %638 = vmatprep.subr.mxu0 0.0
  %639 = vmatpush2.msra.mxu0 %v103
  %640 = vmatprep.subr.mxu0 0.0
  %641 = vmatpush2.msra.mxu0 %v102
  %642 = vmatprep.subr.mxu0 0.0
  %643 = vmatpush2.msra.mxu0 %v101
  %644 = vmatprep.subr.mxu0 0.0
  %645 = vmatpush2.msra.mxu0 %v100
  %646 = vmatprep.mubr.f32.mxu0 %v326
  %647 = vmatmul.mubr.f32.gmra.mxu0 %v316
  %v648 = vpop.f32.mrf.mxu0
  %v649 = vadd.f32 %v534, %v648
  %v650 = vpop.f32.mrf.mxu0
  %651 = vmatprep.mubr.f32.mxu0 %v327
  %652 = vmatmul.mubr.f32.gmra.mxu0 %v317
  %v653 = vpop.f32.mrf.mxu0
  %v654 = vadd.f32 %v539, %v653
  %v655 = vpop.f32.mrf.mxu0
  %656 = vmatprep.mubr.f32.mxu0 %v328
  %657 = vmatmul.mubr.f32.gmra.mxu0 %v318
  %v658 = vpop.f32.mrf.mxu0
  %v659 = vadd.f32 %v544, %v658
  %v660 = vpop.f32.mrf.mxu0
  %661 = vmatprep.mubr.f32.mxu0 %v329
  %662 = vmatmul.mubr.f32.gmra.mxu0 %v319
  %v663 = vpop.f32.mrf.mxu0
  %v664 = vadd.f32 %v549, %v663
  %v665 = vpop.f32.mrf.mxu0
  %666 = vmatprep.mubr.f32.mxu0 %v330
  %667 = vmatmul.mubr.f32.gmra.mxu0 %v320
  %v668 = vpop.f32.mrf.mxu0
  %v669 = vadd.f32 %v554, %v668
  %v670 = vpop.f32.mrf.mxu0
  %671 = vmatprep.mubr.f32.mxu0 %v331
  %672 = vmatmul.mubr.f32.gmra.mxu0 %v321
  %v673 = vpop.f32.mrf.mxu0
  %v674 = vadd.f32 %v559, %v673
  %v675 = vpop.f32.mrf.mxu0
  %676 = vmatprep.mubr.f32.mxu0 %v332
  %677 = vmatmul.mubr.f32.gmra.mxu0 %v322
  %v678 = vpop.f32.mrf.mxu0
  %v679 = vadd.f32 %v564, %v678
  %v680 = vpop.f32.mrf.mxu0
  %681 = vmatprep.mubr.f32.mxu0 %v333
  %682 = vmatmul.mubr.f32.gmra.mxu0 %v323
  %v683 = vpop.f32.mrf.mxu0
  %v684 = vadd.f32 %v569, %v683
  %v685 = vpop.f32.mrf.mxu0
  %686 = vmatprep.mubr.f32.mxu0 %v334
  %687 = vmatmul.mubr.f32.gmra.mxu0 %v324
  %v688 = vpop.f32.mrf.mxu0
  %v689 = vadd.f32 %v574, %v688
  %v690 = vpop.f32.mrf.mxu0
  %691 = vmatprep.mubr.f32.mxu0 %v335
  %692 = vmatmul.mubr.f32.gmra.mxu0 %v325
  %v693 = vpop.f32.mrf.mxu0
  %v694 = vadd.f32 %v579, %v693
  %v695 = vpop.f32.mrf.mxu0
  %696 = vdwg.mxu0
  %697 = vmatprep.subr.mxu0 0.0
  %698 = vmatpush1.msra.mxu0 %v131
  %699 = vmatprep.subr.mxu0 0.0
  %700 = vmatpush1.msra.mxu0 %v130
  %701 = vmatprep.subr.mxu0 0.0
  %702 = vmatpush1.msra.mxu0 %v129
  %703 = vmatprep.subr.mxu0 0.0
  %704 = vmatpush1.msra.mxu0 %v128
  %705 = vmatprep.subr.mxu0 0.0
  %706 = vmatpush1.msra.mxu0 %v127
  %707 = vmatprep.subr.mxu0 0.0
  %708 = vmatpush1.msra.mxu0 %v126
  %709 = vmatprep.subr.mxu0 0.0
  %710 = vmatpush1.msra.mxu0 %v125
  %711 = vmatprep.subr.mxu0 0.0
  %712 = vmatpush1.msra.mxu0 %v124
  %713 = vmatprep.subr.mxu0 0.0
  %714 = vmatpush1.msra.mxu0 %v123
  %715 = vmatprep.subr.mxu0 0.0
  %716 = vmatpush1.msra.mxu0 %v122
  %717 = vmatprep.subr.mxu0 0.0
  %718 = vmatpush1.msra.mxu0 %v121
  %719 = vmatprep.subr.mxu0 0.0
  %720 = vmatpush1.msra.mxu0 %v120
  %721 = vmatprep.subr.mxu0 0.0
  %722 = vmatpush1.msra.mxu0 %v119
  %723 = vmatprep.subr.mxu0 0.0
  %724 = vmatpush1.msra.mxu0 %v118
  %725 = vmatprep.subr.mxu0 0.0
  %726 = vmatpush1.msra.mxu0 %v117
  %727 = vmatprep.subr.mxu0 0.0
  %728 = vmatpush1.msra.mxu0 %v116
  %729 = vmatprep.subr.mxu0 0.0
  %730 = vmatpush2.msra.mxu0 0.0
  %731 = vmatprep.subr.mxu0 0.0
  %732 = vmatpush2.msra.mxu0 0.0
  %733 = vmatprep.subr.mxu0 0.0
  %734 = vmatpush2.msra.mxu0 0.0
  %735 = vmatprep.subr.mxu0 0.0
  %736 = vmatpush2.msra.mxu0 0.0
  %737 = vmatprep.subr.mxu0 0.0
  %738 = vmatpush2.msra.mxu0 0.0
  %739 = vmatprep.subr.mxu0 0.0
  %740 = vmatpush2.msra.mxu0 0.0
  %741 = vmatprep.subr.mxu0 0.0
  %742 = vmatpush2.msra.mxu0 0.0
  %743 = vmatprep.subr.mxu0 0.0
  %744 = vmatpush2.msra.mxu0 0.0
  %745 = vmatprep.subr.mxu0 0.0
  %746 = vmatpush2.msra.mxu0 0.0
  %747 = vmatprep.subr.mxu0 0.0
  %748 = vmatpush2.msra.mxu0 0.0
  %749 = vmatprep.subr.mxu0 0.0
  %750 = vmatpush2.msra.mxu0 0.0
  %751 = vmatprep.subr.mxu0 0.0
  %752 = vmatpush2.msra.mxu0 0.0
  %753 = vmatprep.subr.mxu0 0.0
  %754 = vmatpush2.msra.mxu0 0.0
  %755 = vmatprep.subr.mxu0 0.0
  %756 = vmatpush2.msra.mxu0 0.0
  %757 = vmatprep.subr.mxu0 0.0
  %758 = vmatpush2.msra.mxu0 0.0
  %759 = vmatprep.subr.mxu0 0.0
  %760 = vmatpush2.msra.mxu0 0.0
  %761 = vmatprep.mubr.f32.mxu0 0.0
  %762 = vmatmul.mubr.f32.gmra.mxu0 %v336
  %v763 = vpop.f32.mrf.mxu0
  %v764 = vadd.f32 %v649, %v763
  %v765 = vpop.f32.mrf.mxu0
  %766 = vmatprep.mubr.f32.mxu0 0.0
  %767 = vmatmul.mubr.f32.gmra.mxu0 %v337
  %v768 = vpop.f32.mrf.mxu0
  %v769 = vadd.f32 %v654, %v768
  %v770 = vpop.f32.mrf.mxu0
  %771 = vmatprep.mubr.f32.mxu0 0.0
  %772 = vmatmul.mubr.f32.gmra.mxu0 %v338
  %v773 = vpop.f32.mrf.mxu0
  %v774 = vadd.f32 %v659, %v773
  %v775 = vpop.f32.mrf.mxu0
  %776 = vmatprep.mubr.f32.mxu0 0.0
  %777 = vmatmul.mubr.f32.gmra.mxu0 %v339
  %v778 = vpop.f32.mrf.mxu0
  %v779 = vadd.f32 %v664, %v778
  %v780 = vpop.f32.mrf.mxu0
  %781 = vmatprep.mubr.f32.mxu0 0.0
  %782 = vmatmul.mubr.f32.gmra.mxu0 %v340
  %v783 = vpop.f32.mrf.mxu0
  %v784 = vadd.f32 %v669, %v783
  %v785 = vpop.f32.mrf.mxu0
  %786 = vmatprep.mubr.f32.mxu0 0.0
  %787 = vmatmul.mubr.f32.gmra.mxu0 %v341
  %v788 = vpop.f32.mrf.mxu0
  %v789 = vadd.f32 %v674, %v788
  %v790 = vpop.f32.mrf.mxu0
  %791 = vmatprep.mubr.f32.mxu0 0.0
  %792 = vmatmul.mubr.f32.gmra.mxu0 %v342
  %v793 = vpop.f32.mrf.mxu0
  %v794 = vadd.f32 %v679, %v793
  %v795 = vpop.f32.mrf.mxu0
  %796 = vmatprep.mubr.f32.mxu0 0.0
  %797 = vmatmul.mubr.f32.gmra.mxu0 %v343
  %v798 = vpop.f32.mrf.mxu0
  %v799 = vadd.f32 %v684, %v798
  %v800 = vpop.f32.mrf.mxu0
  %801 = vmatprep.mubr.f32.mxu0 0.0
  %802 = vmatmul.mubr.f32.gmra.mxu0 %v344
  %v803 = vpop.f32.mrf.mxu0
  %v804 = vadd.f32 %v689, %v803
  %v805 = vpop.f32.mrf.mxu0
  %806 = vmatprep.mubr.f32.mxu0 0.0
  %807 = vmatmul.mubr.f32.gmra.mxu0 %v345
  %v808 = vpop.f32.mrf.mxu0
  %v809 = vadd.f32 %v694, %v808
  %v810 = vpop.f32.mrf.mxu0
  %811 = vdwg.mxu0
  %vm812 = vcmp.gt.f32.partialorder %v764, 0.0
  %vm813 = vcmp.gt.f32.partialorder %v769, 0.0
  %vm814 = vcmp.gt.f32.partialorder %v774, 0.0
  %vm815 = vcmp.gt.f32.partialorder %v779, 0.0
  %vm816 = vcmp.gt.f32.partialorder %v784, 0.0
  %vm817 = vcmp.gt.f32.partialorder %v789, 0.0
  %vm818 = vcmp.gt.f32.partialorder %v794, 0.0
  %vm819 = vcmp.gt.f32.partialorder %v799, 0.0
  %vm820 = vcmp.gt.f32.partialorder %v804, 0.0
  %vm821 = vcmp.gt.f32.partialorder %v809, 0.0
  %v822 = vmul.f32 %v764, 0.01
  %v823 = vmul.f32 %v769, 0.01
  %v824 = vmul.f32 %v774, 0.01
  %v825 = vmul.f32 %v779, 0.01
  %v826 = vmul.f32 %v784, 0.01
  %v827 = vmul.f32 %v789, 0.01
  %v828 = vmul.f32 %v794, 0.01
  %v829 = vmul.f32 %v799, 0.01
  %v830 = vmul.f32 %v804, 0.01
  %v831 = vmul.f32 %v809, 0.01
  %v832 = vsel %vm812, %v764, %v822
  %v833 = vsel %vm813, %v769, %v823
  %v834 = vsel %vm814, %v774, %v824
  %v835 = vsel %vm815, %v779, %v825
  %v836 = vsel %vm816, %v784, %v826
  %v837 = vsel %vm817, %v789, %v827
  %v838 = vsel %vm818, %v794, %v828
  %v839 = vsel %vm819, %v799, %v829
  %v840 = vsel %vm820, %v804, %v830
  %v841 = vsel %vm821, %v809, %v831
  %v842 = vlaneseq
  %v843 = vshrl.u32 %v842, 7
  %v844 = vadd.s32 %v843, 8
  %v845 = vadd.s32 %v843, 16
  %v846 = vadd.s32 %v843, 24
  %v847 = vadd.s32 %v843, 32
  %vm848 = vcmp.lt.s32.totalorder %v843, 28
  %vm849 = vcmp.lt.s32.totalorder %v844, 28
  %vm850 = vcmp.lt.s32.totalorder %v845, 28
  %vm851 = vcmp.lt.s32.totalorder %v846, 28
  %vm852 = vcmp.lt.s32.totalorder %v847, 28
  %v853 = vsel %vm848, 1, 0
  %v854 = vsel %vm849, 1, 0
  %v855 = vsel %vm850, 1, 0
  %v856 = vsel %vm851, 1, 0
  %v857 = vsel %vm852, 1, 0
  %858 = vset.pattern.permute.xlu0 0
  %859 = vperm.xlu0 %858, %v853
  %v860 = vpop.permute.xlu0 %859
  %861 = vset.pattern.permute.xlu0 0
  %862 = vperm.xlu0 %861, %v854
  %v863 = vpop.permute.xlu0 %862
  %864 = vset.pattern.permute.xlu0 0
  %865 = vperm.xlu0 %864, %v855
  %v866 = vpop.permute.xlu0 %865
  %867 = vset.pattern.permute.xlu0 0
  %868 = vperm.xlu0 %867, %v856
  %v869 = vpop.permute.xlu0 %868
  %870 = vset.pattern.permute.xlu0 0
  %871 = vperm.xlu0 %870, %v857
  %v872 = vpop.permute.xlu0 %871
  %vm873 = vcmp.eq.s32.totalorder %v860, 1
  %vm874 = vcmp.eq.s32.totalorder %v863, 1
  %vm875 = vcmp.eq.s32.totalorder %v866, 1
  %vm876 = vcmp.eq.s32.totalorder %v869, 1
  %vm877 = vcmp.eq.s32.totalorder %v872, 1
  %v878 = vsel %vm873, %v832, 0.0
  %v879 = vsel %vm874, %v833, 0.0
  %v880 = vsel %vm875, %v834, 0.0
  %v881 = vsel %vm876, %v835, 0.0
  %v882 = vsel %vm877, %v836, 0.0
  %v883 = vsel %vm873, %v837, 0.0
  %v884 = vsel %vm874, %v838, 0.0
  %v885 = vsel %vm875, %v839, 0.0
  %v886 = vsel %vm876, %v840, 0.0
  %v887 = vsel %vm877, %v841, 0.0
  %vm888 = vcmask 64512
  %v889 = vsel %vm888, %v878, 0.0
  %v890 = vsel %vm888, %v879, 0.0
  %v891 = vsel %vm888, %v880, 0.0
  %v892 = vsel %vm888, %v881, 0.0
  %v893 = vsel %vm888, %v882, 0.0
  %v894 = vsel %vm888, %v883, 0.0
  %v895 = vsel %vm888, %v884, 0.0
  %v896 = vsel %vm888, %v885, 0.0
  %v897 = vsel %vm888, %v886, 0.0
  %v898 = vsel %vm888, %v887, 0.0
  %899 = vst [vmem:[#allocation3] sm:$0x1] 0.0
  %900 = vst [vmem:[#allocation3 + $0x1] sm:$0xff] %v889
  %901 = vst [vmem:[#allocation3 + $0x9] sm:$0xff] %v890
  %902 = vst [vmem:[#allocation3 + $0x11] sm:$0xff] %v891
  %903 = vst [vmem:[#allocation3 + $0x19] sm:$0xff] %v892
  %904 = vst [vmem:[#allocation3 + $0x21] sm:$0xff] %v893
  %905 = vst [vmem:[#allocation3 + $0x29] sm:$0xff] %v894
  %906 = vst [vmem:[#allocation3 + $0x31] sm:$0xff] %v895
  %907 = vst [vmem:[#allocation3 + $0x39] sm:$0xff] %v896
  %908 = vst [vmem:[#allocation3 + $0x41] sm:$0xff] %v897
  %909 = vst [vmem:[#allocation3 + $0x49] sm:$0x3] %v898
  %910 = vst [vmem:[#allocation3 + $0x4b] sm:$0x1f] 0.0
  %v911 = vld [vmem:[#allocation3] sm:$0xff]
  %v912 = vld [vmem:[#allocation3 + $0x8] sm:$0xff]
  %v913 = vld [vmem:[#allocation3 + $0x10] sm:$0xff]
  %v914 = vld [vmem:[#allocation3 + $0x18] sm:$0xff]
  %v915 = vld [vmem:[#allocation3 + $0x20] sm:$0xff]
  %v916 = vld [vmem:[#allocation3 + $0x28] sm:$0xff]
  %v917 = vld [vmem:[#allocation3 + $0x30] sm:$0xff]
  %v918 = vld [vmem:[#allocation3 + $0x38] sm:$0xff]
  %v919 = vld [vmem:[#allocation3 + $0x40] sm:$0xff]
  %v920 = vld [vmem:[#allocation3 + $0x48] sm:$0x3]
  %v921 = vld [vmem:[#allocation3 + $0x1] sm:$0xff]
  %v922 = vld [vmem:[#allocation3 + $0x9] sm:$0xff]
  %v923 = vld [vmem:[#allocation3 + $0x11] sm:$0xff]
  %v924 = vld [vmem:[#allocation3 + $0x19] sm:$0xff]
  %v925 = vld [vmem:[#allocation3 + $0x21] sm:$0xff]
  %v926 = vld [vmem:[#allocation3 + $0x29] sm:$0xff]
  %v927 = vld [vmem:[#allocation3 + $0x31] sm:$0xff]
  %v928 = vld [vmem:[#allocation3 + $0x39] sm:$0xff]
  %v929 = vld [vmem:[#allocation3 + $0x41] sm:$0xff]
  %v930 = vld [vmem:[#allocation3 + $0x49] sm:$0x3]
  %v931 = vld [vmem:[#allocation3 + $0x2] sm:$0xff]
  %v932 = vld [vmem:[#allocation3 + $0xa] sm:$0xff]
  %v933 = vld [vmem:[#allocation3 + $0x12] sm:$0xff]
  %v934 = vld [vmem:[#allocation3 + $0x1a] sm:$0xff]
  %v935 = vld [vmem:[#allocation3 + $0x22] sm:$0xff]
  %v936 = vld [vmem:[#allocation3 + $0x2a] sm:$0xff]
  %v937 = vld [vmem:[#allocation3 + $0x32] sm:$0xff]
  %v938 = vld [vmem:[#allocation3 + $0x3a] sm:$0xff]
  %v939 = vld [vmem:[#allocation3 + $0x42] sm:$0xff]
  %v940 = vld [vmem:[#allocation3 + $0x4a] sm:$0x3]
  %v941 = vld [vmem:[#allocation3 + $0x3] sm:$0xff]
  %v942 = vld [vmem:[#allocation3 + $0xb] sm:$0xff]
  %v943 = vld [vmem:[#allocation3 + $0x13] sm:$0xff]
  %v944 = vld [vmem:[#allocation3 + $0x1b] sm:$0xff]
  %v945 = vld [vmem:[#allocation3 + $0x23] sm:$0xff]
  %v946 = vld [vmem:[#allocation3 + $0x2b] sm:$0xff]
  %v947 = vld [vmem:[#allocation3 + $0x33] sm:$0xff]
  %v948 = vld [vmem:[#allocation3 + $0x3b] sm:$0xff]
  %v949 = vld [vmem:[#allocation3 + $0x43] sm:$0xff]
  %v950 = vld [vmem:[#allocation3 + $0x4b] sm:$0x3]
  %v951 = vld [vmem:[#allocation3 + $0x4] sm:$0xff]
  %v952 = vld [vmem:[#allocation3 + $0xc] sm:$0xff]
  %v953 = vld [vmem:[#allocation3 + $0x14] sm:$0xff]
  %v954 = vld [vmem:[#allocation3 + $0x1c] sm:$0xff]
  %v955 = vld [vmem:[#allocation3 + $0x24] sm:$0xff]
  %v956 = vld [vmem:[#allocation3 + $0x2c] sm:$0xff]
  %v957 = vld [vmem:[#allocation3 + $0x34] sm:$0xff]
  %v958 = vld [vmem:[#allocation3 + $0x3c] sm:$0xff]
  %v959 = vld [vmem:[#allocation3 + $0x44] sm:$0xff]
  %v960 = vld [vmem:[#allocation3 + $0x4c] sm:$0x3]
  %v961 = vld [vmem:[#allocation3 + $0x5] sm:$0xff]
  %v962 = vld [vmem:[#allocation3 + $0xd] sm:$0xff]
  %v963 = vld [vmem:[#allocation3 + $0x15] sm:$0xff]
  %v964 = vld [vmem:[#allocation3 + $0x1d] sm:$0xff]
  %v965 = vld [vmem:[#allocation3 + $0x25] sm:$0xff]
  %v966 = vld [vmem:[#allocation3 + $0x2d] sm:$0xff]
  %v967 = vld [vmem:[#allocation3 + $0x35] sm:$0xff]
  %v968 = vld [vmem:[#allocation3 + $0x3d] sm:$0xff]
  %v969 = vld [vmem:[#allocation3 + $0x45] sm:$0xff]
  %v970 = vld [vmem:[#allocation3 + $0x4d] sm:$0x3]
  %v971 = vld [vmem:[#allocation3 + $0x6] sm:$0xff]
  %v972 = vld [vmem:[#allocation3 + $0xe] sm:$0xff]
  %v973 = vld [vmem:[#allocation3 + $0x16] sm:$0xff]
  %v974 = vld [vmem:[#allocation3 + $0x1e] sm:$0xff]
  %v975 = vld [vmem:[#allocation3 + $0x26] sm:$0xff]
  %v976 = vld [vmem:[#allocation3 + $0x2e] sm:$0xff]
  %v977 = vld [vmem:[#allocation3 + $0x36] sm:$0xff]
  %v978 = vld [vmem:[#allocation3 + $0x3e] sm:$0xff]
  %v979 = vld [vmem:[#allocation3 + $0x46] sm:$0xff]
  %v980 = vld [vmem:[#allocation3 + $0x4e] sm:$0x3]
  %v981 = vld [vmem:[#allocation2 + $0x1] sm:$0xff]
  %v982 = vld [vmem:[#allocation2 + $0x9] sm:$0xff]
  %v983 = vld [vmem:[#allocation2 + $0x11] sm:$0xff]
  %v984 = vld [vmem:[#allocation2 + $0x19] sm:$0xff]
  %v985 = vld [vmem:[#allocation2 + $0x21] sm:$0xff]
  %v986 = vld [vmem:[#allocation2 + $0x29] sm:$0xff]
  %v987 = vld [vmem:[#allocation2 + $0x31] sm:$0xff]
  %v988 = vld [vmem:[#allocation2 + $0x39] sm:$0xff]
  %v989 = vld [vmem:[#allocation2 + $0x41] sm:$0xff]
  %v990 = vld [vmem:[#allocation2 + $0x49] sm:$0x3]
  %v992 = vlaneseq
  %v993 = vshrl.u32 %v992, 7
  %v994 = vsub.s32 0, %v993
  %v995 = vrot.slane %v245, %v994
  %997 = vmatprep.subr.mxu0 0.0
  %998 = vmatpush1.msra.mxu0 %v147
  %999 = vmatprep.subr.mxu0 0.0
  %1000 = vmatpush1.msra.mxu0 %v146
  %1001 = vmatprep.subr.mxu0 0.0
  %1002 = vmatpush1.msra.mxu0 %v145
  %1003 = vmatprep.subr.mxu0 0.0
  %1004 = vmatpush1.msra.mxu0 %v144
  %1005 = vmatprep.subr.mxu0 0.0
  %1006 = vmatpush1.msra.mxu0 %v143
  %1007 = vmatprep.subr.mxu0 0.0
  %1008 = vmatpush1.msra.mxu0 %v142
  %1009 = vmatprep.subr.mxu0 0.0
  %1010 = vmatpush1.msra.mxu0 %v141
  %1011 = vmatprep.subr.mxu0 0.0
  %1012 = vmatpush1.msra.mxu0 %v140
  %1013 = vmatprep.subr.mxu0 0.0
  %1014 = vmatpush1.msra.mxu0 %v139
  %1015 = vmatprep.subr.mxu0 0.0
  %1016 = vmatpush1.msra.mxu0 %v138
  %1017 = vmatprep.subr.mxu0 0.0
  %1018 = vmatpush1.msra.mxu0 %v137
  %1019 = vmatprep.subr.mxu0 0.0
  %1020 = vmatpush1.msra.mxu0 %v136
  %1021 = vmatprep.subr.mxu0 0.0
  %1022 = vmatpush1.msra.mxu0 %v135
  %1023 = vmatprep.subr.mxu0 0.0
  %1024 = vmatpush1.msra.mxu0 %v134
  %1025 = vmatprep.subr.mxu0 0.0
  %1026 = vmatpush1.msra.mxu0 %v133
  %1027 = vmatprep.subr.mxu0 0.0
  %1028 = vmatpush1.msra.mxu0 %v132
  %1029 = vmatprep.subr.mxu0 0.0
  %1030 = vmatpush2.msra.mxu0 %v163
  %1031 = vmatprep.subr.mxu0 0.0
  %1032 = vmatpush2.msra.mxu0 %v162
  %1033 = vmatprep.subr.mxu0 0.0
  %1034 = vmatpush2.msra.mxu0 %v161
  %1035 = vmatprep.subr.mxu0 0.0
  %1036 = vmatpush2.msra.mxu0 %v160
  %1037 = vmatprep.subr.mxu0 0.0
  %1038 = vmatpush2.msra.mxu0 %v159
  %1039 = vmatprep.subr.mxu0 0.0
  %1040 = vmatpush2.msra.mxu0 %v158
  %1041 = vmatprep.subr.mxu0 0.0
  %1042 = vmatpush2.msra.mxu0 %v157
  %1043 = vmatprep.subr.mxu0 0.0
  %1044 = vmatpush2.msra.mxu0 %v156
  %1045 = vmatprep.subr.mxu0 0.0
  %1046 = vmatpush2.msra.mxu0 %v155
  %1047 = vmatprep.subr.mxu0 0.0
  %1048 = vmatpush2.msra.mxu0 %v154
  %1049 = vmatprep.subr.mxu0 0.0
  %1050 = vmatpush2.msra.mxu0 %v153
  %1051 = vmatprep.subr.mxu0 0.0
  %1052 = vmatpush2.msra.mxu0 %v152
  %1053 = vmatprep.subr.mxu0 0.0
  %1054 = vmatpush2.msra.mxu0 %v151
  %1055 = vmatprep.subr.mxu0 0.0
  %1056 = vmatpush2.msra.mxu0 %v150
  %1057 = vmatprep.subr.mxu0 0.0
  %1058 = vmatpush2.msra.mxu0 %v149
  %1059 = vmatprep.subr.mxu0 0.0
  %1060 = vmatpush2.msra.mxu0 %v148
  %1061 = vmatprep.mubr.f32.mxu0 %v921
  %1062 = vmatmul.mubr.f32.gmra.mxu0 %v911
  %v1063 = vpop.f32.mrf.mxu0
  %v1064 = vadd.f32 %v995, %v1063
  %v1065 = vpop.f32.mrf.mxu0
  %1066 = vmatprep.mubr.f32.mxu0 %v922
  %1067 = vmatmul.mubr.f32.gmra.mxu0 %v912
  %v1068 = vpop.f32.mrf.mxu0
  %v1069 = vadd.f32 %v995, %v1068
  %v1070 = vpop.f32.mrf.mxu0
  %1071 = vmatprep.mubr.f32.mxu0 %v923
  %1072 = vmatmul.mubr.f32.gmra.mxu0 %v913
  %v1073 = vpop.f32.mrf.mxu0
  %v1074 = vadd.f32 %v995, %v1073
  %v1075 = vpop.f32.mrf.mxu0
  %1076 = vmatprep.mubr.f32.mxu0 %v924
  %1077 = vmatmul.mubr.f32.gmra.mxu0 %v914
  %v1078 = vpop.f32.mrf.mxu0
  %v1079 = vadd.f32 %v995, %v1078
  %v1080 = vpop.f32.mrf.mxu0
  %1081 = vmatprep.mubr.f32.mxu0 %v925
  %1082 = vmatmul.mubr.f32.gmra.mxu0 %v915
  %v1083 = vpop.f32.mrf.mxu0
  %v1084 = vadd.f32 %v995, %v1083
  %v1085 = vpop.f32.mrf.mxu0
  %1086 = vmatprep.mubr.f32.mxu0 %v926
  %1087 = vmatmul.mubr.f32.gmra.mxu0 %v916
  %v1088 = vpop.f32.mrf.mxu0
  %v1089 = vadd.f32 %v995, %v1088
  %v1090 = vpop.f32.mrf.mxu0
  %1091 = vmatprep.mubr.f32.mxu0 %v927
  %1092 = vmatmul.mubr.f32.gmra.mxu0 %v917
  %v1093 = vpop.f32.mrf.mxu0
  %v1094 = vadd.f32 %v995, %v1093
  %v1095 = vpop.f32.mrf.mxu0
  %1096 = vmatprep.mubr.f32.mxu0 %v928
  %1097 = vmatmul.mubr.f32.gmra.mxu0 %v918
  %v1098 = vpop.f32.mrf.mxu0
  %v1099 = vadd.f32 %v995, %v1098
  %v1100 = vpop.f32.mrf.mxu0
  %1101 = vmatprep.mubr.f32.mxu0 %v929
  %1102 = vmatmul.mubr.f32.gmra.mxu0 %v919
  %v1103 = vpop.f32.mrf.mxu0
  %v1104 = vadd.f32 %v995, %v1103
  %v1105 = vpop.f32.mrf.mxu0
  %1106 = vmatprep.mubr.f32.mxu0 %v930
  %1107 = vmatmul.mubr.f32.gmra.mxu0 %v920
  %v1108 = vpop.f32.mrf.mxu0
  %v1109 = vadd.f32 %v995, %v1108
  %v1110 = vpop.f32.mrf.mxu0
  %1111 = vdwg.mxu0
  %1112 = vmatprep.subr.mxu0 0.0
  %1113 = vmatpush1.msra.mxu0 %v179
  %1114 = vmatprep.subr.mxu0 0.0
  %1115 = vmatpush1.msra.mxu0 %v178
  %1116 = vmatprep.subr.mxu0 0.0
  %1117 = vmatpush1.msra.mxu0 %v177
  %1118 = vmatprep.subr.mxu0 0.0
  %1119 = vmatpush1.msra.mxu0 %v176
  %1120 = vmatprep.subr.mxu0 0.0
  %1121 = vmatpush1.msra.mxu0 %v175
  %1122 = vmatprep.subr.mxu0 0.0
  %1123 = vmatpush1.msra.mxu0 %v174
  %1124 = vmatprep.subr.mxu0 0.0
  %1125 = vmatpush1.msra.mxu0 %v173
  %1126 = vmatprep.subr.mxu0 0.0
  %1127 = vmatpush1.msra.mxu0 %v172
  %1128 = vmatprep.subr.mxu0 0.0
  %1129 = vmatpush1.msra.mxu0 %v171
  %1130 = vmatprep.subr.mxu0 0.0
  %1131 = vmatpush1.msra.mxu0 %v170
  %1132 = vmatprep.subr.mxu0 0.0
  %1133 = vmatpush1.msra.mxu0 %v169
  %1134 = vmatprep.subr.mxu0 0.0
  %1135 = vmatpush1.msra.mxu0 %v168
  %1136 = vmatprep.subr.mxu0 0.0
  %1137 = vmatpush1.msra.mxu0 %v167
  %1138 = vmatprep.subr.mxu0 0.0
  %1139 = vmatpush1.msra.mxu0 %v166
  %1140 = vmatprep.subr.mxu0 0.0
  %1141 = vmatpush1.msra.mxu0 %v165
  %1142 = vmatprep.subr.mxu0 0.0
  %1143 = vmatpush1.msra.mxu0 %v164
  %1144 = vmatprep.subr.mxu0 0.0
  %1145 = vmatpush2.msra.mxu0 %v195
  %1146 = vmatprep.subr.mxu0 0.0
  %1147 = vmatpush2.msra.mxu0 %v194
  %1148 = vmatprep.subr.mxu0 0.0
  %1149 = vmatpush2.msra.mxu0 %v193
  %1150 = vmatprep.subr.mxu0 0.0
  %1151 = vmatpush2.msra.mxu0 %v192
  %1152 = vmatprep.subr.mxu0 0.0
  %1153 = vmatpush2.msra.mxu0 %v191
  %1154 = vmatprep.subr.mxu0 0.0
  %1155 = vmatpush2.msra.mxu0 %v190
  %1156 = vmatprep.subr.mxu0 0.0
  %1157 = vmatpush2.msra.mxu0 %v189
  %1158 = vmatprep.subr.mxu0 0.0
  %1159 = vmatpush2.msra.mxu0 %v188
  %1160 = vmatprep.subr.mxu0 0.0
  %1161 = vmatpush2.msra.mxu0 %v187
  %1162 = vmatprep.subr.mxu0 0.0
  %1163 = vmatpush2.msra.mxu0 %v186
  %1164 = vmatprep.subr.mxu0 0.0
  %1165 = vmatpush2.msra.mxu0 %v185
  %1166 = vmatprep.subr.mxu0 0.0
  %1167 = vmatpush2.msra.mxu0 %v184
  %1168 = vmatprep.subr.mxu0 0.0
  %1169 = vmatpush2.msra.mxu0 %v183
  %1170 = vmatprep.subr.mxu0 0.0
  %1171 = vmatpush2.msra.mxu0 %v182
  %1172 = vmatprep.subr.mxu0 0.0
  %1173 = vmatpush2.msra.mxu0 %v181
  %1174 = vmatprep.subr.mxu0 0.0
  %1175 = vmatpush2.msra.mxu0 %v180
  %1176 = vmatprep.mubr.f32.mxu0 %v941
  %1177 = vmatmul.mubr.f32.gmra.mxu0 %v931
  %v1178 = vpop.f32.mrf.mxu0
  %v1179 = vadd.f32 %v1064, %v1178
  %v1180 = vpop.f32.mrf.mxu0
  %1181 = vmatprep.mubr.f32.mxu0 %v942
  %1182 = vmatmul.mubr.f32.gmra.mxu0 %v932
  %v1183 = vpop.f32.mrf.mxu0
  %v1184 = vadd.f32 %v1069, %v1183
  %v1185 = vpop.f32.mrf.mxu0
  %1186 = vmatprep.mubr.f32.mxu0 %v943
  %1187 = vmatmul.mubr.f32.gmra.mxu0 %v933
  %v1188 = vpop.f32.mrf.mxu0
  %v1189 = vadd.f32 %v1074, %v1188
  %v1190 = vpop.f32.mrf.mxu0
  %1191 = vmatprep.mubr.f32.mxu0 %v944
  %1192 = vmatmul.mubr.f32.gmra.mxu0 %v934
  %v1193 = vpop.f32.mrf.mxu0
  %v1194 = vadd.f32 %v1079, %v1193
  %v1195 = vpop.f32.mrf.mxu0
  %1196 = vmatprep.mubr.f32.mxu0 %v945
  %1197 = vmatmul.mubr.f32.gmra.mxu0 %v935
  %v1198 = vpop.f32.mrf.mxu0
  %v1199 = vadd.f32 %v1084, %v1198
  %v1200 = vpop.f32.mrf.mxu0
  %1201 = vmatprep.mubr.f32.mxu0 %v946
  %1202 = vmatmul.mubr.f32.gmra.mxu0 %v936
  %v1203 = vpop.f32.mrf.mxu0
  %v1204 = vadd.f32 %v1089, %v1203
  %v1205 = vpop.f32.mrf.mxu0
  %1206 = vmatprep.mubr.f32.mxu0 %v947
  %1207 = vmatmul.mubr.f32.gmra.mxu0 %v937
  %v1208 = vpop.f32.mrf.mxu0
  %v1209 = vadd.f32 %v1094, %v1208
  %v1210 = vpop.f32.mrf.mxu0
  %1211 = vmatprep.mubr.f32.mxu0 %v948
  %1212 = vmatmul.mubr.f32.gmra.mxu0 %v938
  %v1213 = vpop.f32.mrf.mxu0
  %v1214 = vadd.f32 %v1099, %v1213
  %v1215 = vpop.f32.mrf.mxu0
  %1216 = vmatprep.mubr.f32.mxu0 %v949
  %1217 = vmatmul.mubr.f32.gmra.mxu0 %v939
  %v1218 = vpop.f32.mrf.mxu0
  %v1219 = vadd.f32 %v1104, %v1218
  %v1220 = vpop.f32.mrf.mxu0
  %1221 = vmatprep.mubr.f32.mxu0 %v950
  %1222 = vmatmul.mubr.f32.gmra.mxu0 %v940
  %v1223 = vpop.f32.mrf.mxu0
  %v1224 = vadd.f32 %v1109, %v1223
  %v1225 = vpop.f32.mrf.mxu0
  %1226 = vdwg.mxu0
  %1227 = vmatprep.subr.mxu0 0.0
  %1228 = vmatpush1.msra.mxu0 %v211
  %1229 = vmatprep.subr.mxu0 0.0
  %1230 = vmatpush1.msra.mxu0 %v210
  %1231 = vmatprep.subr.mxu0 0.0
  %1232 = vmatpush1.msra.mxu0 %v209
  %1233 = vmatprep.subr.mxu0 0.0
  %1234 = vmatpush1.msra.mxu0 %v208
  %1235 = vmatprep.subr.mxu0 0.0
  %1236 = vmatpush1.msra.mxu0 %v207
  %1237 = vmatprep.subr.mxu0 0.0
  %1238 = vmatpush1.msra.mxu0 %v206
  %1239 = vmatprep.subr.mxu0 0.0
  %1240 = vmatpush1.msra.mxu0 %v205
  %1241 = vmatprep.subr.mxu0 0.0
  %1242 = vmatpush1.msra.mxu0 %v204
  %1243 = vmatprep.subr.mxu0 0.0
  %1244 = vmatpush1.msra.mxu0 %v203
  %1245 = vmatprep.subr.mxu0 0.0
  %1246 = vmatpush1.msra.mxu0 %v202
  %1247 = vmatprep.subr.mxu0 0.0
  %1248 = vmatpush1.msra.mxu0 %v201
  %1249 = vmatprep.subr.mxu0 0.0
  %1250 = vmatpush1.msra.mxu0 %v200
  %1251 = vmatprep.subr.mxu0 0.0
  %1252 = vmatpush1.msra.mxu0 %v199
  %1253 = vmatprep.subr.mxu0 0.0
  %1254 = vmatpush1.msra.mxu0 %v198
  %1255 = vmatprep.subr.mxu0 0.0
  %1256 = vmatpush1.msra.mxu0 %v197
  %1257 = vmatprep.subr.mxu0 0.0
  %1258 = vmatpush1.msra.mxu0 %v196
  %1259 = vmatprep.subr.mxu0 0.0
  %1260 = vmatpush2.msra.mxu0 %v227
  %1261 = vmatprep.subr.mxu0 0.0
  %1262 = vmatpush2.msra.mxu0 %v226
  %1263 = vmatprep.subr.mxu0 0.0
  %1264 = vmatpush2.msra.mxu0 %v225
  %1265 = vmatprep.subr.mxu0 0.0
  %1266 = vmatpush2.msra.mxu0 %v224
  %1267 = vmatprep.subr.mxu0 0.0
  %1268 = vmatpush2.msra.mxu0 %v223
  %1269 = vmatprep.subr.mxu0 0.0
  %1270 = vmatpush2.msra.mxu0 %v222
  %1271 = vmatprep.subr.mxu0 0.0
  %1272 = vmatpush2.msra.mxu0 %v221
  %1273 = vmatprep.subr.mxu0 0.0
  %1274 = vmatpush2.msra.mxu0 %v220
  %1275 = vmatprep.subr.mxu0 0.0
  %1276 = vmatpush2.msra.mxu0 %v219
  %1277 = vmatprep.subr.mxu0 0.0
  %1278 = vmatpush2.msra.mxu0 %v218
  %1279 = vmatprep.subr.mxu0 0.0
  %1280 = vmatpush2.msra.mxu0 %v217
  %1281 = vmatprep.subr.mxu0 0.0
  %1282 = vmatpush2.msra.mxu0 %v216
  %1283 = vmatprep.subr.mxu0 0.0
  %1284 = vmatpush2.msra.mxu0 %v215
  %1285 = vmatprep.subr.mxu0 0.0
  %1286 = vmatpush2.msra.mxu0 %v214
  %1287 = vmatprep.subr.mxu0 0.0
  %1288 = vmatpush2.msra.mxu0 %v213
  %1289 = vmatprep.subr.mxu0 0.0
  %1290 = vmatpush2.msra.mxu0 %v212
  %1291 = vmatprep.mubr.f32.mxu0 %v961
  %1292 = vmatmul.mubr.f32.gmra.mxu0 %v951
  %v1293 = vpop.f32.mrf.mxu0
  %v1294 = vadd.f32 %v1179, %v1293
  %v1295 = vpop.f32.mrf.mxu0
  %1296 = vmatprep.mubr.f32.mxu0 %v962
  %1297 = vmatmul.mubr.f32.gmra.mxu0 %v952
  %v1298 = vpop.f32.mrf.mxu0
  %v1299 = vadd.f32 %v1184, %v1298
  %v1300 = vpop.f32.mrf.mxu0
  %1301 = vmatprep.mubr.f32.mxu0 %v963
  %1302 = vmatmul.mubr.f32.gmra.mxu0 %v953
  %v1303 = vpop.f32.mrf.mxu0
  %v1304 = vadd.f32 %v1189, %v1303
  %v1305 = vpop.f32.mrf.mxu0
  %1306 = vmatprep.mubr.f32.mxu0 %v964
  %1307 = vmatmul.mubr.f32.gmra.mxu0 %v954
  %v1308 = vpop.f32.mrf.mxu0
  %v1309 = vadd.f32 %v1194, %v1308
  %v1310 = vpop.f32.mrf.mxu0
  %1311 = vmatprep.mubr.f32.mxu0 %v965
  %1312 = vmatmul.mubr.f32.gmra.mxu0 %v955
  %v1313 = vpop.f32.mrf.mxu0
  %v1314 = vadd.f32 %v1199, %v1313
  %v1315 = vpop.f32.mrf.mxu0
  %1316 = vmatprep.mubr.f32.mxu0 %v966
  %1317 = vmatmul.mubr.f32.gmra.mxu0 %v956
  %v1318 = vpop.f32.mrf.mxu0
  %v1319 = vadd.f32 %v1204, %v1318
  %v1320 = vpop.f32.mrf.mxu0
  %1321 = vmatprep.mubr.f32.mxu0 %v967
  %1322 = vmatmul.mubr.f32.gmra.mxu0 %v957
  %v1323 = vpop.f32.mrf.mxu0
  %v1324 = vadd.f32 %v1209, %v1323
  %v1325 = vpop.f32.mrf.mxu0
  %1326 = vmatprep.mubr.f32.mxu0 %v968
  %1327 = vmatmul.mubr.f32.gmra.mxu0 %v958
  %v1328 = vpop.f32.mrf.mxu0
  %v1329 = vadd.f32 %v1214, %v1328
  %v1330 = vpop.f32.mrf.mxu0
  %1331 = vmatprep.mubr.f32.mxu0 %v969
  %1332 = vmatmul.mubr.f32.gmra.mxu0 %v959
  %v1333 = vpop.f32.mrf.mxu0
  %v1334 = vadd.f32 %v1219, %v1333
  %v1335 = vpop.f32.mrf.mxu0
  %1336 = vmatprep.mubr.f32.mxu0 %v970
  %1337 = vmatmul.mubr.f32.gmra.mxu0 %v960
  %v1338 = vpop.f32.mrf.mxu0
  %v1339 = vadd.f32 %v1224, %v1338
  %v1340 = vpop.f32.mrf.mxu0
  %1341 = vdwg.mxu0
  %1342 = vmatprep.subr.mxu0 0.0
  %1343 = vmatpush1.msra.mxu0 %v243
  %1344 = vmatprep.subr.mxu0 0.0
  %1345 = vmatpush1.msra.mxu0 %v242
  %1346 = vmatprep.subr.mxu0 0.0
  %1347 = vmatpush1.msra.mxu0 %v241
  %1348 = vmatprep.subr.mxu0 0.0
  %1349 = vmatpush1.msra.mxu0 %v240
  %1350 = vmatprep.subr.mxu0 0.0
  %1351 = vmatpush1.msra.mxu0 %v239
  %1352 = vmatprep.subr.mxu0 0.0
  %1353 = vmatpush1.msra.mxu0 %v238
  %1354 = vmatprep.subr.mxu0 0.0
  %1355 = vmatpush1.msra.mxu0 %v237
  %1356 = vmatprep.subr.mxu0 0.0
  %1357 = vmatpush1.msra.mxu0 %v236
  %1358 = vmatprep.subr.mxu0 0.0
  %1359 = vmatpush1.msra.mxu0 %v235
  %1360 = vmatprep.subr.mxu0 0.0
  %1361 = vmatpush1.msra.mxu0 %v234
  %1362 = vmatprep.subr.mxu0 0.0
  %1363 = vmatpush1.msra.mxu0 %v233
  %1364 = vmatprep.subr.mxu0 0.0
  %1365 = vmatpush1.msra.mxu0 %v232
  %1366 = vmatprep.subr.mxu0 0.0
  %1367 = vmatpush1.msra.mxu0 %v231
  %1368 = vmatprep.subr.mxu0 0.0
  %1369 = vmatpush1.msra.mxu0 %v230
  %1370 = vmatprep.subr.mxu0 0.0
  %1371 = vmatpush1.msra.mxu0 %v229
  %1372 = vmatprep.subr.mxu0 0.0
  %1373 = vmatpush1.msra.mxu0 %v228
  %1374 = vmatprep.subr.mxu0 0.0
  %1375 = vmatpush2.msra.mxu0 0.0
  %1376 = vmatprep.subr.mxu0 0.0
  %1377 = vmatpush2.msra.mxu0 0.0
  %1378 = vmatprep.subr.mxu0 0.0
  %1379 = vmatpush2.msra.mxu0 0.0
  %1380 = vmatprep.subr.mxu0 0.0
  %1381 = vmatpush2.msra.mxu0 0.0
  %1382 = vmatprep.subr.mxu0 0.0
  %1383 = vmatpush2.msra.mxu0 0.0
  %1384 = vmatprep.subr.mxu0 0.0
  %1385 = vmatpush2.msra.mxu0 0.0
  %1386 = vmatprep.subr.mxu0 0.0
  %1387 = vmatpush2.msra.mxu0 0.0
  %1388 = vmatprep.subr.mxu0 0.0
  %1389 = vmatpush2.msra.mxu0 0.0
  %1390 = vmatprep.subr.mxu0 0.0
  %1391 = vmatpush2.msra.mxu0 0.0
  %1392 = vmatprep.subr.mxu0 0.0
  %1393 = vmatpush2.msra.mxu0 0.0
  %1394 = vmatprep.subr.mxu0 0.0
  %1395 = vmatpush2.msra.mxu0 0.0
  %1396 = vmatprep.subr.mxu0 0.0
  %1397 = vmatpush2.msra.mxu0 0.0
  %1398 = vmatprep.subr.mxu0 0.0
  %1399 = vmatpush2.msra.mxu0 0.0
  %1400 = vmatprep.subr.mxu0 0.0
  %1401 = vmatpush2.msra.mxu0 0.0
  %1402 = vmatprep.subr.mxu0 0.0
  %1403 = vmatpush2.msra.mxu0 0.0
  %1404 = vmatprep.subr.mxu0 0.0
  %1405 = vmatpush2.msra.mxu0 0.0
  %1406 = vmatprep.mubr.f32.mxu0 0.0
  %1407 = vmatmul.mubr.f32.gmra.mxu0 %v971
  %v1408 = vpop.f32.mrf.mxu0
  %v1409 = vadd.f32 %v1294, %v1408
  %v1410 = vpop.f32.mrf.mxu0
  %1411 = vmatprep.mubr.f32.mxu0 0.0
  %1412 = vmatmul.mubr.f32.gmra.mxu0 %v972
  %v1413 = vpop.f32.mrf.mxu0
  %v1414 = vadd.f32 %v1299, %v1413
  %v1415 = vpop.f32.mrf.mxu0
  %1416 = vmatprep.mubr.f32.mxu0 0.0
  %1417 = vmatmul.mubr.f32.gmra.mxu0 %v973
  %v1418 = vpop.f32.mrf.mxu0
  %v1419 = vadd.f32 %v1304, %v1418
  %v1420 = vpop.f32.mrf.mxu0
  %1421 = vmatprep.mubr.f32.mxu0 0.0
  %1422 = vmatmul.mubr.f32.gmra.mxu0 %v974
  %v1423 = vpop.f32.mrf.mxu0
  %v1424 = vadd.f32 %v1309, %v1423
  %v1425 = vpop.f32.mrf.mxu0
  %1426 = vmatprep.mubr.f32.mxu0 0.0
  %1427 = vmatmul.mubr.f32.gmra.mxu0 %v975
  %v1428 = vpop.f32.mrf.mxu0
  %v1429 = vadd.f32 %v1314, %v1428
  %v1430 = vpop.f32.mrf.mxu0
  %1431 = vmatprep.mubr.f32.mxu0 0.0
  %1432 = vmatmul.mubr.f32.gmra.mxu0 %v976
  %v1433 = vpop.f32.mrf.mxu0
  %v1434 = vadd.f32 %v1319, %v1433
  %v1435 = vpop.f32.mrf.mxu0
  %1436 = vmatprep.mubr.f32.mxu0 0.0
  %1437 = vmatmul.mubr.f32.gmra.mxu0 %v977
  %v1438 = vpop.f32.mrf.mxu0
  %v1439 = vadd.f32 %v1324, %v1438
  %v1440 = vpop.f32.mrf.mxu0
  %1441 = vmatprep.mubr.f32.mxu0 0.0
  %1442 = vmatmul.mubr.f32.gmra.mxu0 %v978
  %v1443 = vpop.f32.mrf.mxu0
  %v1444 = vadd.f32 %v1329, %v1443
  %v1445 = vpop.f32.mrf.mxu0
  %1446 = vmatprep.mubr.f32.mxu0 0.0
  %1447 = vmatmul.mubr.f32.gmra.mxu0 %v979
  %v1448 = vpop.f32.mrf.mxu0
  %v1449 = vadd.f32 %v1334, %v1448
  %v1450 = vpop.f32.mrf.mxu0
  %1451 = vmatprep.mubr.f32.mxu0 0.0
  %1452 = vmatmul.mubr.f32.gmra.mxu0 %v980
  %v1453 = vpop.f32.mrf.mxu0
  %v1454 = vadd.f32 %v1339, %v1453
  %v1455 = vpop.f32.mrf.mxu0
  %1456 = vdwg.mxu0
  %v1457 = vadd.f32 %v1409, %v981
  %v1458 = vadd.f32 %v1414, %v982
  %v1459 = vadd.f32 %v1419, %v983
  %v1460 = vadd.f32 %v1424, %v984
  %v1461 = vadd.f32 %v1429, %v985
  %v1462 = vadd.f32 %v1434, %v986
  %v1463 = vadd.f32 %v1439, %v987
  %v1464 = vadd.f32 %v1444, %v988
  %v1465 = vadd.f32 %v1449, %v989
  %v1466 = vadd.f32 %v1454, %v990
  %vm1467 = vcmp.gt.f32.partialorder %v1457, 0.0
  %vm1468 = vcmp.gt.f32.partialorder %v1458, 0.0
  %vm1469 = vcmp.gt.f32.partialorder %v1459, 0.0
  %vm1470 = vcmp.gt.f32.partialorder %v1460, 0.0
  %vm1471 = vcmp.gt.f32.partialorder %v1461, 0.0
  %vm1472 = vcmp.gt.f32.partialorder %v1462, 0.0
  %vm1473 = vcmp.gt.f32.partialorder %v1463, 0.0
  %vm1474 = vcmp.gt.f32.partialorder %v1464, 0.0
  %vm1475 = vcmp.gt.f32.partialorder %v1465, 0.0
  %vm1476 = vcmp.gt.f32.partialorder %v1466, 0.0
  %v1477 = vmul.f32 %v1457, 0.01
  %v1478 = vmul.f32 %v1458, 0.01
  %v1479 = vmul.f32 %v1459, 0.01
  %v1480 = vmul.f32 %v1460, 0.01
  %v1481 = vmul.f32 %v1461, 0.01
  %v1482 = vmul.f32 %v1462, 0.01
  %v1483 = vmul.f32 %v1463, 0.01
  %v1484 = vmul.f32 %v1464, 0.01
  %v1485 = vmul.f32 %v1465, 0.01
  %v1486 = vmul.f32 %v1466, 0.01
  %v1487 = vsel %vm1467, %v1457, %v1477
  %v1488 = vsel %vm1468, %v1458, %v1478
  %v1489 = vsel %vm1469, %v1459, %v1479
  %v1490 = vsel %vm1470, %v1460, %v1480
  %v1491 = vsel %vm1471, %v1461, %v1481
  %v1492 = vsel %vm1472, %v1462, %v1482
  %v1493 = vsel %vm1473, %v1463, %v1483
  %v1494 = vsel %vm1474, %v1464, %v1484
  %v1495 = vsel %vm1475, %v1465, %v1485
  %v1496 = vsel %vm1476, %v1466, %v1486
  %1497 = vst.msk [vmem:[#allocation3] sm:$0xff] %vm888, %v1487
  %1498 = vst.msk [vmem:[#allocation3 + $0x8] sm:$0xff] %vm888, %v1488
  %1499 = vst.msk [vmem:[#allocation3 + $0x10] sm:$0xff] %vm888, %v1489
  %1500 = vst.msk [vmem:[#allocation3 + $0x18] sm:$0xff] %vm888, %v1490
  %1501 = vst.msk [vmem:[#allocation3 + $0x20] sm:$0xff] %vm888, %v1491
  %1502 = vst.msk [vmem:[#allocation3 + $0x28] sm:$0xff] %vm888, %v1492
  %1503 = vst.msk [vmem:[#allocation3 + $0x30] sm:$0xff] %vm888, %v1493
  %1504 = vst.msk [vmem:[#allocation3 + $0x38] sm:$0xff] %vm888, %v1494
  %1505 = vst.msk [vmem:[#allocation3 + $0x40] sm:$0xff] %vm888, %v1495
  %vm1506 = vcmask 58368
  %1507 = vst.msk [vmem:[#allocation3 + $0x48] sm:$0x3] %vm1506, %v1496
  loop: start=0, step=1, limit=2
  $region29: #{tpu_custom_call.1} parent=0 // loop_pre_header
    _
  $region30: #{tpu_custom_call.1} parent=0 // loop_header
    %s1509 = sphi 0, %s1513
    %p1510 = scmp.ge.s32.totalorder %s1509, 2
  $region31: #{tpu_custom_call.1} parent=0 // loop_header_branch
    %1512 = sbr.rel (%p1510) target = $region35
  $region32: #{tpu_custom_call.1} parent=0 // loop_body
    %s1514 = smul.u32 %s1509, 40
    %s1515 = scalar_lea.vmem [#allocation3], %s1514
    %v1516 = vld [vmem:[%s1515] sm:$0xff]
    %v1517 = vld [vmem:[%s1515 + $0x8] sm:$0xff]
    %v1518 = vld [vmem:[%s1515 + $0x10] sm:$0xff]
    %s1519 = smul.u32 %s1509, 24
    %s1520 = scalar_lea.vmem %s5, %s1519
    %1521 = vst.msk [vmem:[%s1520] sm:$0xff] %vm888, %v1516
    %1522 = vst.msk [vmem:[%s1520 + $0x8] sm:$0xff] %vm888, %v1517
    %1523 = vst.msk [vmem:[%s1520 + $0x10] sm:$0xff] %vm888, %v1518
  $region33: #{tpu_custom_call.1} parent=0 // loop_footer
    %s1513 = sadd.s32 1, %s1509
  $region34: #{tpu_custom_call.1} parent=0 // loop_footer_branch
    %1508 = sbr.rel target = $region30
  $region35: #{tpu_custom_call.1} parent=0 // loop_exit
    _
  // Predicated region
  $region36: #{tpu_custom_call.1} parent=0 // pred_check
    _
  $region37: #{tpu_custom_call.1} parent=0 // pred_check_branch
    %1525 = sbr.rel (0) target = $region39
  $region38: #{tpu_custom_call.1} parent=0 // pred_region
    _
  $region39: #{tpu_custom_call.1} parent=0 // pred_fallthru
    _
  // Predicated region
  $region40: #{tpu_custom_call.1} parent=0 // pred_check
    _
  $region41: #{tpu_custom_call.1} parent=0 // pred_check_branch
    %1527 = sbr.rel (0) target = $region43
  $region42: #{tpu_custom_call.1} parent=0 // pred_region
    _
  $region43: #{tpu_custom_call.1} parent=0 // pred_fallthru
    _

</llo_original>
